<compile_context>
chip_gen: v5e
topology: v5e:2x2
jax: 0.10.0
libtpu: 0.0.40
codegen_flags: <defaults>
</compile_context>

<pallas_src>
from functools import partial

import jax
import jax.numpy as jnp
from jax.experimental import pallas as pl
from jax.experimental.pallas import tpu as pltpu


# ----------------------------------------------------------------------------
# Fused kernel:  a_3x3(stride s) -> a_1x1*BNscale + shift -> ReLU
#                -> b_3x3(stride 1) -> b_1x1*BNscale + shift
# One grid step == NB images; everything between input and output lives in VMEM.
# ----------------------------------------------------------------------------
def _fused_kernel(planes_ref, wa_ref, w1a_ref, sha_ref, wb_ref, w1b_ref,
                  shb_ref, o_ref, rpad_ref, *, stride):
    f32 = jnp.float32
    NB, Hp, Wp, Cout = rpad_ref.shape
    Ho, Wo = Hp - 2, Wp - 2
    Cin = planes_ref.shape[-1]
    s = stride
    M = NB * Ho * Wo

    # ---- a_3x3: depthwise 3x3, stride s, padding 1 (direct strided output) ----
    # planes_ref[p*s+q, n, a, b, c] == zeropad1(x)[n, s*a+p, s*b+q, c], so tap
    # (kh, kw) of output (i, j) is a unit-stride slice of one parity plane.
    wa = wa_ref[...].astype(f32)                         # (3, 3, Cin)
    acc_a = jnp.zeros((NB, Ho, Wo, Cin), f32)
    for kh in range(3):
        for kw in range(3):
            plane = (kh % s) * s + (kw % s)
            patch = planes_ref[plane, :,
                               kh // s:kh // s + Ho,
                               kw // s:kw // s + Wo, :].astype(f32)
            acc_a = acc_a + patch * wa[kh, kw, :]

    # ---- a_1x1 (graph-masked talk conv, BN scale pre-folded) + shift + ReLU ----
    # Single 2-D MXU matmul over M flattened pixels (NT form, like q @ k.T).
    acc_a2 = acc_a.reshape(M, Cin)
    r = jnp.einsum("mc,dc->md", acc_a2, w1a_ref[...].astype(f32),
                   preferred_element_type=f32)           # (M, Cout)
    r = jnp.maximum(r + sha_ref[...], 0.0)               # sha is (1, Cout)
    r = r.reshape(NB, Ho, Wo, Cout)

    # ---- b_3x3: depthwise 3x3, stride 1, padding 1, on the VMEM intermediate --
    # Zero only the 1-wide halo border each step; interior is fully overwritten.
    zrow = jnp.zeros((NB, 1, Wp, Cout), f32)
    zcol = jnp.zeros((NB, Ho, 1, Cout), f32)
    rpad_ref[:, 0:1, :, :] = zrow
    rpad_ref[:, Ho + 1:Ho + 2, :, :] = zrow
    rpad_ref[:, 1:Ho + 1, 0:1, :] = zcol
    rpad_ref[:, 1:Ho + 1, Wo + 1:Wo + 2, :] = zcol
    rpad_ref[:, 1:Ho + 1, 1:Wo + 1, :] = r

    wb = wb_ref[...].astype(f32)                         # (3, 3, Cout)
    acc_b = jnp.zeros((NB, Ho, Wo, Cout), f32)
    for kh in range(3):
        for kw in range(3):
            acc_b = acc_b + rpad_ref[:, kh:kh + Ho, kw:kw + Wo, :] * wb[kh, kw, :]

    # ---- b_1x1 (masked talk conv, BN scale folded) + final BN shift ------------
    # Computed transposed so the output store is lane-dense: (Cout, M).
    acc_b2 = acc_b.reshape(M, Cout)
    yT = jnp.einsum("ed,md->em", w1b_ref[...].astype(f32), acc_b2,
                    preferred_element_type=f32)          # (Cout, M)
    o_ref[...] = (yT + shb_ref[...]).astype(o_ref.dtype)  # shb is (Cout, 1)


# ----------------------------------------------------------------------------
# Wrapper-side input prep: parity planes of the zero-padded input so the kernel
# computes the strided conv with unit-stride slices only.  Every plane is padded
# explicitly to (A, B) so odd H/W with stride 2 is handled correctly.
# ----------------------------------------------------------------------------
def _make_conv_planes(x_nhwc, stride):
    """planes[p*s + q, n, a, b, c] = zeropad1(x)[n, s*a + p, s*b + q, c]."""
    N, H, W, C = x_nhwc.shape
    s = stride
    Ho = (H - 1) // s + 1
    Wo = (W - 1) // s + 1
    A = Ho + 2 // s
    B = Wo + 2 // s
    xp = jnp.pad(x_nhwc, ((0, 0), (1, 1), (1, 1), (0, 0)))
    planes = []
    for p in range(s):
        for q in range(s):
            pq = xp[:, p::s, q::s, :][:, :A, :B, :]
            pad_a = A - pq.shape[1]
            pad_b = B - pq.shape[2]
            if pad_a or pad_b:
                pq = jnp.pad(pq, ((0, 0), (0, pad_a), (0, pad_b), (0, 0)))
            planes.append(pq)
    return jnp.stack(planes, axis=0), Ho, Wo             # (s*s, N, A, B, C)


def _pick_nb(n, per_img_bytes, budget_bytes=6 << 20, max_nb=8):
    """Largest divisor of n (<= max_nb) whose per-step VMEM fits the budget."""
    nb = 1
    for cand in range(1, min(n, max_nb) + 1):
        if n % cand == 0 and cand * per_img_bytes <= budget_bytes:
            nb = cand
    return nb


@partial(jax.jit, static_argnums=(2,))
def group_sep_talk_forward(x_nchw, params, stride):
    x = jnp.transpose(x_nchw, (0, 2, 3, 1))              # NCHW -> NHWC (boundary)
    N, H, W, Cin = x.shape
    Cout = params["b_shift"].shape[-1]
    s = stride
    planes, Ho, Wo = _make_conv_planes(x, s)
    A, B = planes.shape[2], planes.shape[3]

    per_img = 4 * (2 * s * s * A * B * Cin
                   + Ho * Wo * (Cin + 3 * Cout)
                   + (Ho + 2) * (Wo + 2) * Cout)
    NB = _pick_nb(N, per_img)
    G = N // NB
    Mb = NB * Ho * Wo

    a_shift = params["a_shift"].reshape(1, Cout)          # broadcast over M rows
    b_shift = params["b_shift"].reshape(Cout, 1)          # broadcast over M lanes

    yT = pl.pallas_call(
        partial(_fused_kernel, stride=s),
        out_shape=jax.ShapeDtypeStruct((Cout, N * Ho * Wo), x.dtype),
        grid=(G,),
        in_specs=[
            pl.BlockSpec((s * s, NB, A, B, Cin), lambda n: (0, n, 0, 0, 0)),
            pl.BlockSpec((3, 3, Cin), lambda n: (0, 0, 0)),
            pl.BlockSpec((Cout, Cin), lambda n: (0, 0)),
            pl.BlockSpec((1, Cout), lambda n: (0, 0)),
            pl.BlockSpec((3, 3, Cout), lambda n: (0, 0, 0)),
            pl.BlockSpec((Cout, Cout), lambda n: (0, 0)),
            pl.BlockSpec((Cout, 1), lambda n: (0, 0)),
        ],
        out_specs=pl.BlockSpec((Cout, Mb), lambda n: (0, n)),
        scratch_shapes=[pltpu.VMEM((NB, Ho + 2, Wo + 2, Cout), jnp.float32)],
        compiler_params=pltpu.CompilerParams(
            dimension_semantics=("parallel",)),
    )(planes, params["a3x3_w"], params["a1x1_w"], a_shift,
      params["b3x3_w"], params["b1x1_w"], b_shift)

    # (Cout, N*Ho*Wo) -> NCHW with one layout pass.
    y = yT.reshape(Cout, N, Ho, Wo)
    return jnp.transpose(y, (1, 0, 2, 3))


# ----------------------------------------------------------------------------
# Parameter construction (deterministic, in-script)
# ----------------------------------------------------------------------------
def make_talk_mask(dim_out, dim_in, num_groups):
    """Relational-graph channel mask: ring graph over groups with self loops.
    (Stands in for the cfg.RGRAPH-generated graph of TalkConv2d.)"""
    idx = jnp.arange(num_groups)
    adj = jnp.zeros((num_groups, num_groups), jnp.float32)
    adj = adj.at[idx, idx].set(1.0)
    adj = adj.at[idx, (idx + 1) % num_groups].set(1.0)
    adj = adj.at[idx, (idx - 1) % num_groups].set(1.0)
    out_g = jnp.arange(dim_out) // (dim_out // num_groups)
    in_g = jnp.arange(dim_in) // (dim_in // num_groups)
    return adj[out_g[:, None], in_g[None, :]]            # (Cout, Cin)


def fold_bn(gamma, beta, mean, var, eps):
    scale = gamma / jnp.sqrt(var + eps)
    shift = beta - mean * scale
    return scale, shift


def init_params(key, dim_in, dim_out, num_gs, eps=1e-5):
    ks = jax.random.split(key, 12)
    p = {}
    # depthwise 3x3 weights, stored as (3, 3, C)
    p["a3x3_w"] = jax.random.normal(ks[0], (3, 3, dim_in), jnp.float32) * 0.1
    p["b3x3_w"] = jax.random.normal(ks[1], (3, 3, dim_out), jnp.float32) * 0.1
    # talk 1x1 weights (Cout, Cin), masked by relational graph
    mask_a = make_talk_mask(dim_out, dim_in, num_gs)
    mask_b = make_talk_mask(dim_out, dim_out, num_gs)
    wa = jax.random.normal(ks[2], (dim_out, dim_in), jnp.float32) * 0.1
    wb = jax.random.normal(ks[3], (dim_out, dim_out), jnp.float32) * 0.1
    # BatchNorm2d (eval semantics: running stats folded to scale/shift); the
    # per-output-channel BN scale is folded straight into the masked 1x1 weight.
    # TODO(synk): training-mode batch statistics not implemented; BN uses running stats.
    bn = {}
    for tag, k0 in (("a", 4), ("b", 8)):
        gamma = 0.5 + jax.random.uniform(ks[k0 + 0], (dim_out,), jnp.float32)
        beta = 0.1 * jax.random.normal(ks[k0 + 1], (dim_out,), jnp.float32)
        mean = 0.1 * jax.random.normal(ks[k0 + 2], (dim_out,), jnp.float32)
        var = 0.5 + jax.random.uniform(ks[k0 + 3], (dim_out,), jnp.float32)
        bn[tag] = fold_bn(gamma, beta, mean, var, eps)
    p["a1x1_w"] = (wa * mask_a) * bn["a"][0][:, None]    # (Cout, Cin), BN-scaled
    p["b1x1_w"] = (wb * mask_b) * bn["b"][0][:, None]    # (Cout, Cout), BN-scaled
    p["a_shift"] = bn["a"][1]                            # (Cout,)
    p["b_shift"] = bn["b"][1]                            # (Cout,)
    return p


# ----------------------------------------------------------------------------
# Pure-JAX reference (same folded parameterization) for a runtime self-check
# ----------------------------------------------------------------------------
def _ref_forward(x_nchw, params, stride):
    x = jnp.transpose(x_nchw, (0, 2, 3, 1))
    hi = jax.lax.Precision.HIGHEST

    def dw3x3(v, w33c, s):
        f = w33c[:, :, None, :]                          # HWIO, I=1 (depthwise)
        return jax.lax.conv_general_dilated(
            v, f, window_strides=(s, s), padding=((1, 1), (1, 1)),
            dimension_numbers=("NHWC", "HWIO", "NHWC"),
            feature_group_count=v.shape[-1], precision=hi)

    a = dw3x3(x, params["a3x3_w"], stride)
    r = jnp.einsum("nhwc,dc->nhwd", a, params["a1x1_w"], precision=hi)
    r = jnp.maximum(r + params["a_shift"], 0.0)
    b = dw3x3(r, params["b3x3_w"], 1)
    y = jnp.einsum("nhwd,ed->nhwe", b, params["b1x1_w"], precision=hi)
    y = y + params["b_shift"]
    return jnp.transpose(y, (0, 3, 1, 2))


if __name__ == "__main__":
    N, dim_in, dim_out = 2, 16, 32
    stride = 2
    num_gs = 4  # cfg.RGRAPH.GROUP_NUM stand-in

    key = jax.random.PRNGKey(0)
    kx, kx2, kp = jax.random.split(key, 3)
    params = init_params(kp, dim_in, dim_out, num_gs)

    # Main check: even spatial dims.
    H = W = 16
    x = jax.random.normal(kx, (N, dim_in, H, W), jnp.float32)   # NCHW input
    out = jax.block_until_ready(group_sep_talk_forward(x, params, stride))
    assert out.shape == (N, dim_out, (H - 1) // stride + 1,
                         (W - 1) // stride + 1), out.shape
    ref = _ref_forward(x, params, stride)
    err = float(jnp.max(jnp.abs(out - ref)))
    assert err < 5e-3, f"max abs err {err}"

    # Secondary check: odd spatial dims (exercises the parity-plane padding fix).
    H2, W2 = 15, 13
    x2 = jax.random.normal(kx2, (N, dim_in, H2, W2), jnp.float32)
    out2 = jax.block_until_ready(group_sep_talk_forward(x2, params, stride))
    assert out2.shape == (N, dim_out, (H2 - 1) // stride + 1,
                          (W2 - 1) // stride + 1), out2.shape
    ref2 = _ref_forward(x2, params, stride)
    err2 = float(jnp.max(jnp.abs(out2 - ref2)))
    assert err2 < 5e-3, f"max abs err {err2}"

    print("KERNEL_OK")
</pallas_src>

<mosaic_0001>
module attributes {stable_mosaic.version = 11 : i64} {
  func.func @_fused_kernel(%arg0: i32, %arg1: memref<4x2x9x9x16xf32, #tpu.memory_space<vmem>>, %arg2: memref<3x3x16xf32, #tpu.memory_space<vmem>>, %arg3: memref<32x16xf32, #tpu.memory_space<vmem>>, %arg4: memref<1x32xf32, #tpu.memory_space<vmem>>, %arg5: memref<3x3x32xf32, #tpu.memory_space<vmem>>, %arg6: memref<32x32xf32, #tpu.memory_space<vmem>>, %arg7: memref<32x1xf32, #tpu.memory_space<vmem>>, %arg8: memref<32x128xf32, #tpu.memory_space<vmem>>, %arg9: memref<2x10x10x32xf32, #tpu.memory_space<vmem>>) attributes {dimension_semantics = [#tpu.dimension_semantics<parallel>], iteration_bounds = array<i64: 1>, scalar_prefetch = 0 : i64, scratch_operands = 1 : i64, tpu.core_type = #tpu.core_type<tc>, window_params = [{transform_indices = @transform_0, window_bounds = array<i64: 4, 2, 9, 9, 16>}, {pipeline_mode = #tpu.pipeline_mode<synchronous>, transform_indices = @transform_1, window_bounds = array<i64: 3, 3, 16>}, {pipeline_mode = #tpu.pipeline_mode<synchronous>, transform_indices = @transform_2, window_bounds = array<i64: 32, 16>}, {pipeline_mode = #tpu.pipeline_mode<synchronous>, transform_indices = @transform_3, window_bounds = array<i64: 1, 32>}, {pipeline_mode = #tpu.pipeline_mode<synchronous>, transform_indices = @transform_4, window_bounds = array<i64: 3, 3, 32>}, {pipeline_mode = #tpu.pipeline_mode<synchronous>, transform_indices = @transform_5, window_bounds = array<i64: 32, 32>}, {pipeline_mode = #tpu.pipeline_mode<synchronous>, transform_indices = @transform_6, window_bounds = array<i64: 32, 1>}, {transform_indices = @transform_7, window_bounds = array<i64: 32, 128>}]} {
    %c0 = arith.constant 0 : index
    %c0_0 = arith.constant 0 : index
    %c0_1 = arith.constant 0 : index
    %0 = vector.load %arg2[%c0, %c0_0, %c0_1] : memref<3x3x16xf32, #tpu.memory_space<vmem>>, vector<3x3x16xf32>
    %cst = arith.constant 0.000000e+00 : f32
    %1 = vector.broadcast %cst : f32 to vector<2x8x8x16xf32>
    %c0_2 = arith.constant 0 : index
    %c0_3 = arith.constant 0 : index
    %c0_4 = arith.constant 0 : index
    %c0_5 = arith.constant 0 : index
    %c0_6 = arith.constant 0 : index
    %2 = vector.load %arg1[%c0_2, %c0_3, %c0_4, %c0_5, %c0_6] : memref<4x2x9x9x16xf32, #tpu.memory_space<vmem>>, vector<1x2x8x8x16xf32>
    %3 = vector.shape_cast %2 : vector<1x2x8x8x16xf32> to vector<2x8x8x16xf32>
    %4 = vector.extract_strided_slice %0 {offsets = [0, 0, 0], sizes = [1, 1, 16], strides = [1, 1, 1]} : vector<3x3x16xf32> to vector<1x1x16xf32>
    %5 = vector.shape_cast %4 : vector<1x1x16xf32> to vector<16xf32>
    %6 = vector.shape_cast %5 : vector<16xf32> to vector<1x1x1x16xf32>
    %7 = vector.broadcast %6 : vector<1x1x1x16xf32> to vector<2x8x8x16xf32>
    %8 = arith.mulf %3, %7 : vector<2x8x8x16xf32>
    %9 = arith.addf %1, %8 : vector<2x8x8x16xf32>
    %c1 = arith.constant 1 : index
    %c0_7 = arith.constant 0 : index
    %c0_8 = arith.constant 0 : index
    %c0_9 = arith.constant 0 : index
    %c0_10 = arith.constant 0 : index
    %10 = vector.load %arg1[%c1, %c0_7, %c0_8, %c0_9, %c0_10] : memref<4x2x9x9x16xf32, #tpu.memory_space<vmem>>, vector<1x2x8x8x16xf32>
    %11 = vector.shape_cast %10 : vector<1x2x8x8x16xf32> to vector<2x8x8x16xf32>
    %12 = vector.extract_strided_slice %0 {offsets = [0, 1, 0], sizes = [1, 1, 16], strides = [1, 1, 1]} : vector<3x3x16xf32> to vector<1x1x16xf32>
    %13 = vector.shape_cast %12 : vector<1x1x16xf32> to vector<16xf32>
    %14 = vector.shape_cast %13 : vector<16xf32> to vector<1x1x1x16xf32>
    %15 = vector.broadcast %14 : vector<1x1x1x16xf32> to vector<2x8x8x16xf32>
    %16 = arith.mulf %11, %15 : vector<2x8x8x16xf32>
    %17 = arith.addf %9, %16 : vector<2x8x8x16xf32>
    %c0_11 = arith.constant 0 : index
    %c0_12 = arith.constant 0 : index
    %c0_13 = arith.constant 0 : index
    %c1_14 = arith.constant 1 : index
    %c0_15 = arith.constant 0 : index
    %18 = vector.load %arg1[%c0_11, %c0_12, %c0_13, %c1_14, %c0_15] : memref<4x2x9x9x16xf32, #tpu.memory_space<vmem>>, vector<1x2x8x8x16xf32>
    %19 = vector.shape_cast %18 : vector<1x2x8x8x16xf32> to vector<2x8x8x16xf32>
    %20 = vector.extract_strided_slice %0 {offsets = [0, 2, 0], sizes = [1, 1, 16], strides = [1, 1, 1]} : vector<3x3x16xf32> to vector<1x1x16xf32>
    %21 = vector.shape_cast %20 : vector<1x1x16xf32> to vector<16xf32>
    %22 = vector.shape_cast %21 : vector<16xf32> to vector<1x1x1x16xf32>
    %23 = vector.broadcast %22 : vector<1x1x1x16xf32> to vector<2x8x8x16xf32>
    %24 = arith.mulf %19, %23 : vector<2x8x8x16xf32>
    %25 = arith.addf %17, %24 : vector<2x8x8x16xf32>
    %c2 = arith.constant 2 : index
    %c0_16 = arith.constant 0 : index
    %c0_17 = arith.constant 0 : index
    %c0_18 = arith.constant 0 : index
    %c0_19 = arith.constant 0 : index
    %26 = vector.load %arg1[%c2, %c0_16, %c0_17, %c0_18, %c0_19] : memref<4x2x9x9x16xf32, #tpu.memory_space<vmem>>, vector<1x2x8x8x16xf32>
    %27 = vector.shape_cast %26 : vector<1x2x8x8x16xf32> to vector<2x8x8x16xf32>
    %28 = vector.extract_strided_slice %0 {offsets = [1, 0, 0], sizes = [1, 1, 16], strides = [1, 1, 1]} : vector<3x3x16xf32> to vector<1x1x16xf32>
    %29 = vector.shape_cast %28 : vector<1x1x16xf32> to vector<16xf32>
    %30 = vector.shape_cast %29 : vector<16xf32> to vector<1x1x1x16xf32>
    %31 = vector.broadcast %30 : vector<1x1x1x16xf32> to vector<2x8x8x16xf32>
    %32 = arith.mulf %27, %31 : vector<2x8x8x16xf32>
    %33 = arith.addf %25, %32 : vector<2x8x8x16xf32>
    %c3 = arith.constant 3 : index
    %c0_20 = arith.constant 0 : index
    %c0_21 = arith.constant 0 : index
    %c0_22 = arith.constant 0 : index
    %c0_23 = arith.constant 0 : index
    %34 = vector.load %arg1[%c3, %c0_20, %c0_21, %c0_22, %c0_23] : memref<4x2x9x9x16xf32, #tpu.memory_space<vmem>>, vector<1x2x8x8x16xf32>
    %35 = vector.shape_cast %34 : vector<1x2x8x8x16xf32> to vector<2x8x8x16xf32>
    %36 = vector.extract_strided_slice %0 {offsets = [1, 1, 0], sizes = [1, 1, 16], strides = [1, 1, 1]} : vector<3x3x16xf32> to vector<1x1x16xf32>
    %37 = vector.shape_cast %36 : vector<1x1x16xf32> to vector<16xf32>
    %38 = vector.shape_cast %37 : vector<16xf32> to vector<1x1x1x16xf32>
    %39 = vector.broadcast %38 : vector<1x1x1x16xf32> to vector<2x8x8x16xf32>
    %40 = arith.mulf %35, %39 : vector<2x8x8x16xf32>
    %41 = arith.addf %33, %40 : vector<2x8x8x16xf32>
    %c2_24 = arith.constant 2 : index
    %c0_25 = arith.constant 0 : index
    %c0_26 = arith.constant 0 : index
    %c1_27 = arith.constant 1 : index
    %c0_28 = arith.constant 0 : index
    %42 = vector.load %arg1[%c2_24, %c0_25, %c0_26, %c1_27, %c0_28] : memref<4x2x9x9x16xf32, #tpu.memory_space<vmem>>, vector<1x2x8x8x16xf32>
    %43 = vector.shape_cast %42 : vector<1x2x8x8x16xf32> to vector<2x8x8x16xf32>
    %44 = vector.extract_strided_slice %0 {offsets = [1, 2, 0], sizes = [1, 1, 16], strides = [1, 1, 1]} : vector<3x3x16xf32> to vector<1x1x16xf32>
    %45 = vector.shape_cast %44 : vector<1x1x16xf32> to vector<16xf32>
    %46 = vector.shape_cast %45 : vector<16xf32> to vector<1x1x1x16xf32>
    %47 = vector.broadcast %46 : vector<1x1x1x16xf32> to vector<2x8x8x16xf32>
    %48 = arith.mulf %43, %47 : vector<2x8x8x16xf32>
    %49 = arith.addf %41, %48 : vector<2x8x8x16xf32>
    %c0_29 = arith.constant 0 : index
    %c0_30 = arith.constant 0 : index
    %c1_31 = arith.constant 1 : index
    %c0_32 = arith.constant 0 : index
    %c0_33 = arith.constant 0 : index
    %50 = vector.load %arg1[%c0_29, %c0_30, %c1_31, %c0_32, %c0_33] : memref<4x2x9x9x16xf32, #tpu.memory_space<vmem>>, vector<1x2x8x8x16xf32>
    %51 = vector.shape_cast %50 : vector<1x2x8x8x16xf32> to vector<2x8x8x16xf32>
    %52 = vector.extract_strided_slice %0 {offsets = [2, 0, 0], sizes = [1, 1, 16], strides = [1, 1, 1]} : vector<3x3x16xf32> to vector<1x1x16xf32>
    %53 = vector.shape_cast %52 : vector<1x1x16xf32> to vector<16xf32>
    %54 = vector.shape_cast %53 : vector<16xf32> to vector<1x1x1x16xf32>
    %55 = vector.broadcast %54 : vector<1x1x1x16xf32> to vector<2x8x8x16xf32>
    %56 = arith.mulf %51, %55 : vector<2x8x8x16xf32>
    %57 = arith.addf %49, %56 : vector<2x8x8x16xf32>
    %c1_34 = arith.constant 1 : index
    %c0_35 = arith.constant 0 : index
    %c1_36 = arith.constant 1 : index
    %c0_37 = arith.constant 0 : index
    %c0_38 = arith.constant 0 : index
    %58 = vector.load %arg1[%c1_34, %c0_35, %c1_36, %c0_37, %c0_38] : memref<4x2x9x9x16xf32, #tpu.memory_space<vmem>>, vector<1x2x8x8x16xf32>
    %59 = vector.shape_cast %58 : vector<1x2x8x8x16xf32> to vector<2x8x8x16xf32>
    %60 = vector.extract_strided_slice %0 {offsets = [2, 1, 0], sizes = [1, 1, 16], strides = [1, 1, 1]} : vector<3x3x16xf32> to vector<1x1x16xf32>
    %61 = vector.shape_cast %60 : vector<1x1x16xf32> to vector<16xf32>
    %62 = vector.shape_cast %61 : vector<16xf32> to vector<1x1x1x16xf32>
    %63 = vector.broadcast %62 : vector<1x1x1x16xf32> to vector<2x8x8x16xf32>
    %64 = arith.mulf %59, %63 : vector<2x8x8x16xf32>
    %65 = arith.addf %57, %64 : vector<2x8x8x16xf32>
    %c0_39 = arith.constant 0 : index
    %c0_40 = arith.constant 0 : index
    %c1_41 = arith.constant 1 : index
    %c1_42 = arith.constant 1 : index
    %c0_43 = arith.constant 0 : index
    %66 = vector.load %arg1[%c0_39, %c0_40, %c1_41, %c1_42, %c0_43] : memref<4x2x9x9x16xf32, #tpu.memory_space<vmem>>, vector<1x2x8x8x16xf32>
    %67 = vector.shape_cast %66 : vector<1x2x8x8x16xf32> to vector<2x8x8x16xf32>
    %68 = vector.extract_strided_slice %0 {offsets = [2, 2, 0], sizes = [1, 1, 16], strides = [1, 1, 1]} : vector<3x3x16xf32> to vector<1x1x16xf32>
    %69 = vector.shape_cast %68 : vector<1x1x16xf32> to vector<16xf32>
    %70 = vector.shape_cast %69 : vector<16xf32> to vector<1x1x1x16xf32>
    %71 = vector.broadcast %70 : vector<1x1x1x16xf32> to vector<2x8x8x16xf32>
    %72 = arith.mulf %67, %71 : vector<2x8x8x16xf32>
    %73 = arith.addf %65, %72 : vector<2x8x8x16xf32>
    %74 = vector.shape_cast %73 : vector<2x8x8x16xf32> to vector<128x16xf32>
    %c0_44 = arith.constant 0 : index
    %c0_45 = arith.constant 0 : index
    %75 = vector.load %arg3[%c0_44, %c0_45] : memref<32x16xf32, #tpu.memory_space<vmem>>, vector<32x16xf32>
    "tpu.trace_start"() <{level = 10 : i32, message = "mc,dc->md"}> : () -> ()
    %cst_46 = arith.constant dense<0.000000e+00> : vector<128x32xf32>
    %76 = tpu.matmul %74, %75, %cst_46 {dimension_numbers = #tpu.dot_dimension_numbers<[1], [1], [0], [0], [0, 0, 1, 0], [], []>} : vector<128x16xf32>, vector<32x16xf32>, vector<128x32xf32> -> vector<128x32xf32>
    "tpu.trace_stop"() : () -> ()
    %c0_47 = arith.constant 0 : index
    %c0_48 = arith.constant 0 : index
    %77 = vector.load %arg4[%c0_47, %c0_48] : memref<1x32xf32, #tpu.memory_space<vmem>>, vector<1x32xf32>
    %78 = vector.broadcast %77 : vector<1x32xf32> to vector<128x32xf32>
    %79 = arith.addf %76, %78 : vector<128x32xf32>
    %cst_49 = arith.constant 0.000000e+00 : f32
    %80 = vector.broadcast %cst_49 : f32 to vector<128x32xf32>
    %81 = arith.maximumf %79, %80 : vector<128x32xf32>
    %82 = vector.shape_cast %81 : vector<128x32xf32> to vector<2x8x8x32xf32>
    %cst_50 = arith.constant 0.000000e+00 : f32
    %83 = vector.broadcast %cst_50 : f32 to vector<2x1x10x32xf32>
    %cst_51 = arith.constant 0.000000e+00 : f32
    %84 = vector.broadcast %cst_51 : f32 to vector<2x8x1x32xf32>
    %c0_52 = arith.constant 0 : index
    %c0_53 = arith.constant 0 : index
    %c0_54 = arith.constant 0 : index
    %c0_55 = arith.constant 0 : index
    %85 = vector.load %arg9[%c0_52, %c0_53, %c0_54, %c0_55] : memref<2x10x10x32xf32, #tpu.memory_space<vmem>>, vector<2x1x10x32xf32>
    tpu.vector_store %arg9[%c0_52, %c0_53, %c0_54, %c0_55], %83 {strides = array<i32>} : memref<2x10x10x32xf32, #tpu.memory_space<vmem>>, vector<2x1x10x32xf32>,
    %c0_56 = arith.constant 0 : index
    %c9 = arith.constant 9 : index
    %c0_57 = arith.constant 0 : index
    %c0_58 = arith.constant 0 : index
    %86 = vector.load %arg9[%c0_56, %c9, %c0_57, %c0_58] : memref<2x10x10x32xf32, #tpu.memory_space<vmem>>, vector<2x1x10x32xf32>
    tpu.vector_store %arg9[%c0_56, %c9, %c0_57, %c0_58], %83 {strides = array<i32>} : memref<2x10x10x32xf32, #tpu.memory_space<vmem>>, vector<2x1x10x32xf32>,
    %c0_59 = arith.constant 0 : index
    %c1_60 = arith.constant 1 : index
    %c0_61 = arith.constant 0 : index
    %c0_62 = arith.constant 0 : index
    %87 = vector.load %arg9[%c0_59, %c1_60, %c0_61, %c0_62] : memref<2x10x10x32xf32, #tpu.memory_space<vmem>>, vector<2x8x1x32xf32>
    tpu.vector_store %arg9[%c0_59, %c1_60, %c0_61, %c0_62], %84 {strides = array<i32>} : memref<2x10x10x32xf32, #tpu.memory_space<vmem>>, vector<2x8x1x32xf32>,
    %c0_63 = arith.constant 0 : index
    %c1_64 = arith.constant 1 : index
    %c9_65 = arith.constant 9 : index
    %c0_66 = arith.constant 0 : index
    %88 = vector.load %arg9[%c0_63, %c1_64, %c9_65, %c0_66] : memref<2x10x10x32xf32, #tpu.memory_space<vmem>>, vector<2x8x1x32xf32>
    tpu.vector_store %arg9[%c0_63, %c1_64, %c9_65, %c0_66], %84 {strides = array<i32>} : memref<2x10x10x32xf32, #tpu.memory_space<vmem>>, vector<2x8x1x32xf32>,
    %c0_67 = arith.constant 0 : index
    %c1_68 = arith.constant 1 : index
    %c1_69 = arith.constant 1 : index
    %c0_70 = arith.constant 0 : index
    %89 = vector.load %arg9[%c0_67, %c1_68, %c1_69, %c0_70] : memref<2x10x10x32xf32, #tpu.memory_space<vmem>>, vector<2x8x8x32xf32>
    tpu.vector_store %arg9[%c0_67, %c1_68, %c1_69, %c0_70], %82 {strides = array<i32>} : memref<2x10x10x32xf32, #tpu.memory_space<vmem>>, vector<2x8x8x32xf32>,
    %c0_71 = arith.constant 0 : index
    %c0_72 = arith.constant 0 : index
    %c0_73 = arith.constant 0 : index
    %90 = vector.load %arg5[%c0_71, %c0_72, %c0_73] : memref<3x3x32xf32, #tpu.memory_space<vmem>>, vector<3x3x32xf32>
    %cst_74 = arith.constant 0.000000e+00 : f32
    %91 = vector.broadcast %cst_74 : f32 to vector<2x8x8x32xf32>
    %c0_75 = arith.constant 0 : index
    %c0_76 = arith.constant 0 : index
    %c0_77 = arith.constant 0 : index
    %c0_78 = arith.constant 0 : index
    %92 = vector.load %arg9[%c0_75, %c0_76, %c0_77, %c0_78] : memref<2x10x10x32xf32, #tpu.memory_space<vmem>>, vector<2x8x8x32xf32>
    %93 = vector.extract_strided_slice %90 {offsets = [0, 0, 0], sizes = [1, 1, 32], strides = [1, 1, 1]} : vector<3x3x32xf32> to vector<1x1x32xf32>
    %94 = vector.shape_cast %93 : vector<1x1x32xf32> to vector<32xf32>
    %95 = vector.shape_cast %94 : vector<32xf32> to vector<1x1x1x32xf32>
    %96 = vector.broadcast %95 : vector<1x1x1x32xf32> to vector<2x8x8x32xf32>
    %97 = arith.mulf %92, %96 : vector<2x8x8x32xf32>
    %98 = arith.addf %91, %97 : vector<2x8x8x32xf32>
    %c0_79 = arith.constant 0 : index
    %c0_80 = arith.constant 0 : index
    %c1_81 = arith.constant 1 : index
    %c0_82 = arith.constant 0 : index
    %99 = vector.load %arg9[%c0_79, %c0_80, %c1_81, %c0_82] : memref<2x10x10x32xf32, #tpu.memory_space<vmem>>, vector<2x8x8x32xf32>
    %100 = vector.extract_strided_slice %90 {offsets = [0, 1, 0], sizes = [1, 1, 32], strides = [1, 1, 1]} : vector<3x3x32xf32> to vector<1x1x32xf32>
    %101 = vector.shape_cast %100 : vector<1x1x32xf32> to vector<32xf32>
    %102 = vector.shape_cast %101 : vector<32xf32> to vector<1x1x1x32xf32>
    %103 = vector.broadcast %102 : vector<1x1x1x32xf32> to vector<2x8x8x32xf32>
    %104 = arith.mulf %99, %103 : vector<2x8x8x32xf32>
    %105 = arith.addf %98, %104 : vector<2x8x8x32xf32>
    %c0_83 = arith.constant 0 : index
    %c0_84 = arith.constant 0 : index
    %c2_85 = arith.constant 2 : index
    %c0_86 = arith.constant 0 : index
    %106 = vector.load %arg9[%c0_83, %c0_84, %c2_85, %c0_86] : memref<2x10x10x32xf32, #tpu.memory_space<vmem>>, vector<2x8x8x32xf32>
    %107 = vector.extract_strided_slice %90 {offsets = [0, 2, 0], sizes = [1, 1, 32], strides = [1, 1, 1]} : vector<3x3x32xf32> to vector<1x1x32xf32>
    %108 = vector.shape_cast %107 : vector<1x1x32xf32> to vector<32xf32>
    %109 = vector.shape_cast %108 : vector<32xf32> to vector<1x1x1x32xf32>
    %110 = vector.broadcast %109 : vector<1x1x1x32xf32> to vector<2x8x8x32xf32>
    %111 = arith.mulf %106, %110 : vector<2x8x8x32xf32>
    %112 = arith.addf %105, %111 : vector<2x8x8x32xf32>
    %c0_87 = arith.constant 0 : index
    %c1_88 = arith.constant 1 : index
    %c0_89 = arith.constant 0 : index
    %c0_90 = arith.constant 0 : index
    %113 = vector.load %arg9[%c0_87, %c1_88, %c0_89, %c0_90] : memref<2x10x10x32xf32, #tpu.memory_space<vmem>>, vector<2x8x8x32xf32>
    %114 = vector.extract_strided_slice %90 {offsets = [1, 0, 0], sizes = [1, 1, 32], strides = [1, 1, 1]} : vector<3x3x32xf32> to vector<1x1x32xf32>
    %115 = vector.shape_cast %114 : vector<1x1x32xf32> to vector<32xf32>
    %116 = vector.shape_cast %115 : vector<32xf32> to vector<1x1x1x32xf32>
    %117 = vector.broadcast %116 : vector<1x1x1x32xf32> to vector<2x8x8x32xf32>
    %118 = arith.mulf %113, %117 : vector<2x8x8x32xf32>
    %119 = arith.addf %112, %118 : vector<2x8x8x32xf32>
    %c0_91 = arith.constant 0 : index
    %c1_92 = arith.constant 1 : index
    %c1_93 = arith.constant 1 : index
    %c0_94 = arith.constant 0 : index
    %120 = vector.load %arg9[%c0_91, %c1_92, %c1_93, %c0_94] : memref<2x10x10x32xf32, #tpu.memory_space<vmem>>, vector<2x8x8x32xf32>
    %121 = vector.extract_strided_slice %90 {offsets = [1, 1, 0], sizes = [1, 1, 32], strides = [1, 1, 1]} : vector<3x3x32xf32> to vector<1x1x32xf32>
    %122 = vector.shape_cast %121 : vector<1x1x32xf32> to vector<32xf32>
    %123 = vector.shape_cast %122 : vector<32xf32> to vector<1x1x1x32xf32>
    %124 = vector.broadcast %123 : vector<1x1x1x32xf32> to vector<2x8x8x32xf32>
    %125 = arith.mulf %120, %124 : vector<2x8x8x32xf32>
    %126 = arith.addf %119, %125 : vector<2x8x8x32xf32>
    %c0_95 = arith.constant 0 : index
    %c1_96 = arith.constant 1 : index
    %c2_97 = arith.constant 2 : index
    %c0_98 = arith.constant 0 : index
    %127 = vector.load %arg9[%c0_95, %c1_96, %c2_97, %c0_98] : memref<2x10x10x32xf32, #tpu.memory_space<vmem>>, vector<2x8x8x32xf32>
    %128 = vector.extract_strided_slice %90 {offsets = [1, 2, 0], sizes = [1, 1, 32], strides = [1, 1, 1]} : vector<3x3x32xf32> to vector<1x1x32xf32>
    %129 = vector.shape_cast %128 : vector<1x1x32xf32> to vector<32xf32>
    %130 = vector.shape_cast %129 : vector<32xf32> to vector<1x1x1x32xf32>
    %131 = vector.broadcast %130 : vector<1x1x1x32xf32> to vector<2x8x8x32xf32>
    %132 = arith.mulf %127, %131 : vector<2x8x8x32xf32>
    %133 = arith.addf %126, %132 : vector<2x8x8x32xf32>
    %c0_99 = arith.constant 0 : index
    %c2_100 = arith.constant 2 : index
    %c0_101 = arith.constant 0 : index
    %c0_102 = arith.constant 0 : index
    %134 = vector.load %arg9[%c0_99, %c2_100, %c0_101, %c0_102] : memref<2x10x10x32xf32, #tpu.memory_space<vmem>>, vector<2x8x8x32xf32>
    %135 = vector.extract_strided_slice %90 {offsets = [2, 0, 0], sizes = [1, 1, 32], strides = [1, 1, 1]} : vector<3x3x32xf32> to vector<1x1x32xf32>
    %136 = vector.shape_cast %135 : vector<1x1x32xf32> to vector<32xf32>
    %137 = vector.shape_cast %136 : vector<32xf32> to vector<1x1x1x32xf32>
    %138 = vector.broadcast %137 : vector<1x1x1x32xf32> to vector<2x8x8x32xf32>
    %139 = arith.mulf %134, %138 : vector<2x8x8x32xf32>
    %140 = arith.addf %133, %139 : vector<2x8x8x32xf32>
    %c0_103 = arith.constant 0 : index
    %c2_104 = arith.constant 2 : index
    %c1_105 = arith.constant 1 : index
    %c0_106 = arith.constant 0 : index
    %141 = vector.load %arg9[%c0_103, %c2_104, %c1_105, %c0_106] : memref<2x10x10x32xf32, #tpu.memory_space<vmem>>, vector<2x8x8x32xf32>
    %142 = vector.extract_strided_slice %90 {offsets = [2, 1, 0], sizes = [1, 1, 32], strides = [1, 1, 1]} : vector<3x3x32xf32> to vector<1x1x32xf32>
    %143 = vector.shape_cast %142 : vector<1x1x32xf32> to vector<32xf32>
    %144 = vector.shape_cast %143 : vector<32xf32> to vector<1x1x1x32xf32>
    %145 = vector.broadcast %144 : vector<1x1x1x32xf32> to vector<2x8x8x32xf32>
    %146 = arith.mulf %141, %145 : vector<2x8x8x32xf32>
    %147 = arith.addf %140, %146 : vector<2x8x8x32xf32>
    %c0_107 = arith.constant 0 : index
    %c2_108 = arith.constant 2 : index
    %c2_109 = arith.constant 2 : index
    %c0_110 = arith.constant 0 : index
    %148 = vector.load %arg9[%c0_107, %c2_108, %c2_109, %c0_110] : memref<2x10x10x32xf32, #tpu.memory_space<vmem>>, vector<2x8x8x32xf32>
    %149 = vector.extract_strided_slice %90 {offsets = [2, 2, 0], sizes = [1, 1, 32], strides = [1, 1, 1]} : vector<3x3x32xf32> to vector<1x1x32xf32>
    %150 = vector.shape_cast %149 : vector<1x1x32xf32> to vector<32xf32>
    %151 = vector.shape_cast %150 : vector<32xf32> to vector<1x1x1x32xf32>
    %152 = vector.broadcast %151 : vector<1x1x1x32xf32> to vector<2x8x8x32xf32>
    %153 = arith.mulf %148, %152 : vector<2x8x8x32xf32>
    %154 = arith.addf %147, %153 : vector<2x8x8x32xf32>
    %155 = vector.shape_cast %154 : vector<2x8x8x32xf32> to vector<128x32xf32>
    %c0_111 = arith.constant 0 : index
    %c0_112 = arith.constant 0 : index
    %156 = vector.load %arg6[%c0_111, %c0_112] : memref<32x32xf32, #tpu.memory_space<vmem>>, vector<32x32xf32>
    "tpu.trace_start"() <{level = 10 : i32, message = "ed,md->em"}> : () -> ()
    %cst_113 = arith.constant dense<0.000000e+00> : vector<32x128xf32>
    %157 = tpu.matmul %156, %155, %cst_113 {dimension_numbers = #tpu.dot_dimension_numbers<[1], [1], [0], [0], [0, 0, 1, 0], [], []>} : vector<32x32xf32>, vector<128x32xf32>, vector<32x128xf32> -> vector<32x128xf32>
    "tpu.trace_stop"() : () -> ()
    %c0_114 = arith.constant 0 : index
    %c0_115 = arith.constant 0 : index
    %158 = vector.load %arg7[%c0_114, %c0_115] : memref<32x1xf32, #tpu.memory_space<vmem>>, vector<32x1xf32>
    %159 = vector.broadcast %158 : vector<32x1xf32> to vector<32x128xf32>
    %160 = arith.addf %157, %159 : vector<32x128xf32>
    %c0_116 = arith.constant 0 : index
    %c0_117 = arith.constant 0 : index
    %161 = vector.load %arg8[%c0_116, %c0_117] : memref<32x128xf32, #tpu.memory_space<vmem>>, vector<32x128xf32>
    tpu.vector_store %arg8[%c0_116, %c0_117], %160 {strides = array<i32>} : memref<32x128xf32, #tpu.memory_space<vmem>>, vector<32x128xf32>,
    return
  }
  func.func @transform_0(%arg0: i32) -> (i32, i32, i32, i32, i32) {
    %c0_i32 = arith.constant 0 : i32
    %c0_i32_0 = arith.constant 0 : i32
    %c0_i32_1 = arith.constant 0 : i32
    %c0_i32_2 = arith.constant 0 : i32
    %c0_i32_3 = arith.constant 0 : i32
    return %c0_i32, %arg0, %c0_i32_0, %c0_i32_1, %c0_i32_2 : i32, i32, i32, i32, i32
  }
  func.func @transform_1(%arg0: i32) -> (i32, i32, i32) {
    %c0_i32 = arith.constant 0 : i32
    %c0_i32_0 = arith.constant 0 : i32
    %c0_i32_1 = arith.constant 0 : i32
    %c0_i32_2 = arith.constant 0 : i32
    return %c0_i32, %c0_i32_0, %c0_i32_1 : i32, i32, i32
  }
  func.func @transform_2(%arg0: i32) -> (i32, i32) {
    %c0_i32 = arith.constant 0 : i32
    %c0_i32_0 = arith.constant 0 : i32
    %c0_i32_1 = arith.constant 0 : i32
    return %c0_i32, %c0_i32_0 : i32, i32
  }
  func.func @transform_3(%arg0: i32) -> (i32, i32) {
    %c0_i32 = arith.constant 0 : i32
    %c0_i32_0 = arith.constant 0 : i32
    %c0_i32_1 = arith.constant 0 : i32
    return %c0_i32, %c0_i32_0 : i32, i32
  }
  func.func @transform_4(%arg0: i32) -> (i32, i32, i32) {
    %c0_i32 = arith.constant 0 : i32
    %c0_i32_0 = arith.constant 0 : i32
    %c0_i32_1 = arith.constant 0 : i32
    %c0_i32_2 = arith.constant 0 : i32
    return %c0_i32, %c0_i32_0, %c0_i32_1 : i32, i32, i32
  }
  func.func @transform_5(%arg0: i32) -> (i32, i32) {
    %c0_i32 = arith.constant 0 : i32
    %c0_i32_0 = arith.constant 0 : i32
    %c0_i32_1 = arith.constant 0 : i32
    return %c0_i32, %c0_i32_0 : i32, i32
  }
  func.func @transform_6(%arg0: i32) -> (i32, i32) {
    %c0_i32 = arith.constant 0 : i32
    %c0_i32_0 = arith.constant 0 : i32
    %c0_i32_1 = arith.constant 0 : i32
    return %c0_i32, %c0_i32_0 : i32, i32
  }
  func.func @transform_7(%arg0: i32) -> (i32, i32) {
    %c0_i32 = arith.constant 0 : i32
    %c0_i32_0 = arith.constant 0 : i32
    return %c0_i32, %arg0 : i32, i32
  }
}

</mosaic_0001>

<llo_original>
// kernel: group_sep_talk_forward.1
$region0: #{group_sep_talk_forward.1}
  #allocation0 [shape = 'u32[]', space=smem, size = 0x4, offset = 0x4, fixed_abs, tag = 'smem constant byte address 0x4 - core index']
  #allocation1 [shape = 'u32[72,128]{1,0:T(1,128)}', space=vmem, size = 0x9000, scoped, tag = 'internal scratch']
  #allocation2 [shape = 'f32[2,10,10,32]{3,2,1,0:T(8,128)}', space=vmem, size = 0x28000, scoped, tag = 'scratch operand']
  %s0 = inlined_call_operand.vmem [shape: f32[4,2,9,9,16], index: 0, kind: input, shape index: {}]
  %s1 = inlined_call_operand.vmem [shape: f32[3,3,16], index: 1, kind: input, shape index: {}]
  %s2 = inlined_call_operand.vmem [shape: f32[32,16], index: 2, kind: input, shape index: {}]
  %s3 = inlined_call_operand.vmem [shape: f32[1,32], index: 3, kind: input, shape index: {}]
  %s4 = inlined_call_operand.vmem [shape: f32[3,3,32], index: 4, kind: input, shape index: {}]
  %s5 = inlined_call_operand.vmem [shape: f32[32,32], index: 5, kind: input, shape index: {}]
  %s6 = inlined_call_operand.vmem [shape: f32[32,1], index: 6, kind: input, shape index: {}]
  %s7 = inlined_call_operand.vmem [shape: f32[32,128], index: 7, kind: output, shape index: {}]
  %s8 = sld [smem:[#allocation0]]
  $region38: #{group_sep_talk_forward.1} parent=0
    _
  %s10 = ssub.s32 1, %s8
  %s11 = scalar_select 0, %s10, %s8
  // Predicated region
  $region2: #{group_sep_talk_forward.1} parent=0 // pred_check
    _
  $region3: #{group_sep_talk_forward.1} parent=0 // pred_check_branch
    %13 = sbr.rel (0) target = $region5
  $region4: #{group_sep_talk_forward.1} parent=0 // pred_region
    _
  $region5: #{group_sep_talk_forward.1} parent=0 // pred_fallthru
    _
  // Predicated region
  $region6: #{group_sep_talk_forward.1} parent=0 // pred_check
    _
  $region7: #{group_sep_talk_forward.1} parent=0 // pred_check_branch
    %15 = sbr.rel (0) target = $region9
  $region8: #{group_sep_talk_forward.1} parent=0 // pred_region
    _
  $region9: #{group_sep_talk_forward.1} parent=0 // pred_fallthru
    _
  // Predicated region
  $region10: #{group_sep_talk_forward.1} parent=0 // pred_check
    _
  $region11: #{group_sep_talk_forward.1} parent=0 // pred_check_branch
    %17 = sbr.rel (0) target = $region13
  $region12: #{group_sep_talk_forward.1} parent=0 // pred_region
    _
  $region13: #{group_sep_talk_forward.1} parent=0 // pred_fallthru
    _
  // Predicated region
  $region14: #{group_sep_talk_forward.1} parent=0 // pred_check
    _
  $region15: #{group_sep_talk_forward.1} parent=0 // pred_check_branch
    %19 = sbr.rel (0) target = $region17
  $region16: #{group_sep_talk_forward.1} parent=0 // pred_region
    _
  $region17: #{group_sep_talk_forward.1} parent=0 // pred_fallthru
    _
  // Predicated region
  $region18: #{group_sep_talk_forward.1} parent=0 // pred_check
    _
  $region19: #{group_sep_talk_forward.1} parent=0 // pred_check_branch
    %21 = sbr.rel (0) target = $region21
  $region20: #{group_sep_talk_forward.1} parent=0 // pred_region
    _
  $region21: #{group_sep_talk_forward.1} parent=0 // pred_fallthru
    _
  // Predicated region
  $region22: #{group_sep_talk_forward.1} parent=0 // pred_check
    _
  $region23: #{group_sep_talk_forward.1} parent=0 // pred_check_branch
    %23 = sbr.rel (0) target = $region25
  $region24: #{group_sep_talk_forward.1} parent=0 // pred_region
    _
  $region25: #{group_sep_talk_forward.1} parent=0 // pred_fallthru
    _
  // Predicated region
  $region26: #{group_sep_talk_forward.1} parent=0 // pred_check
    _
  $region27: #{group_sep_talk_forward.1} parent=0 // pred_check_branch
    %25 = sbr.rel (0) target = $region29
  $region28: #{group_sep_talk_forward.1} parent=0 // pred_region
    _
  $region29: #{group_sep_talk_forward.1} parent=0 // pred_fallthru
    _
  %v26 = vld [vmem:[%s1] sm:$0x7]
  %v27 = vld [vmem:[%s1 + $0x4] sm:$0x7]
  %v28 = vld [vmem:[%s1 + $0x8] sm:$0x7]
  %v29 = vld [vmem:[%s0] sm:$0xff]
  %v30 = vld [vmem:[%s0 + $0x10] sm:$0xff]
  %v31 = vld [vmem:[%s0 + $0x20] sm:$0xff]
  %v32 = vld [vmem:[%s0 + $0x30] sm:$0xff]
  %v33 = vld [vmem:[%s0 + $0x40] sm:$0xff]
  %v34 = vld [vmem:[%s0 + $0x50] sm:$0xff]
  %v35 = vld [vmem:[%s0 + $0x60] sm:$0xff]
  %v36 = vld [vmem:[%s0 + $0x70] sm:$0xff]
  %v37 = vld [vmem:[%s0 + $0x90] sm:$0xff]
  %v38 = vld [vmem:[%s0 + $0xa0] sm:$0xff]
  %v39 = vld [vmem:[%s0 + $0xb0] sm:$0xff]
  %v40 = vld [vmem:[%s0 + $0xc0] sm:$0xff]
  %v41 = vld [vmem:[%s0 + $0xd0] sm:$0xff]
  %v42 = vld [vmem:[%s0 + $0xe0] sm:$0xff]
  %v43 = vld [vmem:[%s0 + $0xf0] sm:$0xff]
  %v44 = vld [vmem:[%s0 + $0x100] sm:$0xff]
  %v45 = vperm.slane %v26, 0
  %v46 = vmul.f32 %v29, %v45
  %v47 = vmul.f32 %v30, %v45
  %v48 = vmul.f32 %v31, %v45
  %v49 = vmul.f32 %v32, %v45
  %v50 = vmul.f32 %v33, %v45
  %v51 = vmul.f32 %v34, %v45
  %v52 = vmul.f32 %v35, %v45
  %v53 = vmul.f32 %v36, %v45
  %v54 = vmul.f32 %v37, %v45
  %v55 = vmul.f32 %v38, %v45
  %v56 = vmul.f32 %v39, %v45
  %v57 = vmul.f32 %v40, %v45
  %v58 = vmul.f32 %v41, %v45
  %v59 = vmul.f32 %v42, %v45
  %v60 = vmul.f32 %v43, %v45
  %v61 = vmul.f32 %v44, %v45
  %v62 = vadd.f32 %v46, 0.0
  %v63 = vadd.f32 %v47, 0.0
  %v64 = vadd.f32 %v48, 0.0
  %v65 = vadd.f32 %v49, 0.0
  %v66 = vadd.f32 %v50, 0.0
  %v67 = vadd.f32 %v51, 0.0
  %v68 = vadd.f32 %v52, 0.0
  %v69 = vadd.f32 %v53, 0.0
  %v70 = vadd.f32 %v54, 0.0
  %v71 = vadd.f32 %v55, 0.0
  %v72 = vadd.f32 %v56, 0.0
  %v73 = vadd.f32 %v57, 0.0
  %v74 = vadd.f32 %v58, 0.0
  %v75 = vadd.f32 %v59, 0.0
  %v76 = vadd.f32 %v60, 0.0
  %v77 = vadd.f32 %v61, 0.0
  %s78 = scalar_lea.vmem %s0, 288
  %v79 = vld [vmem:[%s78] sm:$0xff]
  %v80 = vld [vmem:[%s78 + $0x10] sm:$0xff]
  %v81 = vld [vmem:[%s78 + $0x20] sm:$0xff]
  %v82 = vld [vmem:[%s78 + $0x30] sm:$0xff]
  %v83 = vld [vmem:[%s78 + $0x40] sm:$0xff]
  %v84 = vld [vmem:[%s78 + $0x50] sm:$0xff]
  %v85 = vld [vmem:[%s78 + $0x60] sm:$0xff]
  %v86 = vld [vmem:[%s78 + $0x70] sm:$0xff]
  %v87 = vld [vmem:[%s78 + $0x90] sm:$0xff]
  %v88 = vld [vmem:[%s78 + $0xa0] sm:$0xff]
  %v89 = vld [vmem:[%s78 + $0xb0] sm:$0xff]
  %v90 = vld [vmem:[%s78 + $0xc0] sm:$0xff]
  %v91 = vld [vmem:[%s78 + $0xd0] sm:$0xff]
  %v92 = vld [vmem:[%s78 + $0xe0] sm:$0xff]
  %v93 = vld [vmem:[%s78 + $0xf0] sm:$0xff]
  %v94 = vld [vmem:[%s78 + $0x100] sm:$0xff]
  %v95 = vperm.slane %v26, 1
  %v96 = vmul.f32 %v79, %v95
  %v97 = vmul.f32 %v80, %v95
  %v98 = vmul.f32 %v81, %v95
  %v99 = vmul.f32 %v82, %v95
  %v100 = vmul.f32 %v83, %v95
  %v101 = vmul.f32 %v84, %v95
  %v102 = vmul.f32 %v85, %v95
  %v103 = vmul.f32 %v86, %v95
  %v104 = vmul.f32 %v87, %v95
  %v105 = vmul.f32 %v88, %v95
  %v106 = vmul.f32 %v89, %v95
  %v107 = vmul.f32 %v90, %v95
  %v108 = vmul.f32 %v91, %v95
  %v109 = vmul.f32 %v92, %v95
  %v110 = vmul.f32 %v93, %v95
  %v111 = vmul.f32 %v94, %v95
  %v112 = vadd.f32 %v62, %v96
  %v113 = vadd.f32 %v63, %v97
  %v114 = vadd.f32 %v64, %v98
  %v115 = vadd.f32 %v65, %v99
  %v116 = vadd.f32 %v66, %v100
  %v117 = vadd.f32 %v67, %v101
  %v118 = vadd.f32 %v68, %v102
  %v119 = vadd.f32 %v69, %v103
  %v120 = vadd.f32 %v70, %v104
  %v121 = vadd.f32 %v71, %v105
  %v122 = vadd.f32 %v72, %v106
  %v123 = vadd.f32 %v73, %v107
  %v124 = vadd.f32 %v74, %v108
  %v125 = vadd.f32 %v75, %v109
  %v126 = vadd.f32 %v76, %v110
  %v127 = vadd.f32 %v77, %v111
  %v128 = vld [vmem:[%s0 + $0x1] sm:$0xff]
  %v129 = vld [vmem:[%s0 + $0x11] sm:$0xff]
  %v130 = vld [vmem:[%s0 + $0x21] sm:$0xff]
  %v131 = vld [vmem:[%s0 + $0x31] sm:$0xff]
  %v132 = vld [vmem:[%s0 + $0x41] sm:$0xff]
  %v133 = vld [vmem:[%s0 + $0x51] sm:$0xff]
  %v134 = vld [vmem:[%s0 + $0x61] sm:$0xff]
  %v135 = vld [vmem:[%s0 + $0x71] sm:$0xff]
  %v136 = vld [vmem:[%s0 + $0x91] sm:$0xff]
  %v137 = vld [vmem:[%s0 + $0xa1] sm:$0xff]
  %v138 = vld [vmem:[%s0 + $0xb1] sm:$0xff]
  %v139 = vld [vmem:[%s0 + $0xc1] sm:$0xff]
  %v140 = vld [vmem:[%s0 + $0xd1] sm:$0xff]
  %v141 = vld [vmem:[%s0 + $0xe1] sm:$0xff]
  %v142 = vld [vmem:[%s0 + $0xf1] sm:$0xff]
  %v143 = vld [vmem:[%s0 + $0x101] sm:$0xff]
  %v144 = vperm.slane %v26, 2
  %v145 = vmul.f32 %v128, %v144
  %v146 = vmul.f32 %v129, %v144
  %v147 = vmul.f32 %v130, %v144
  %v148 = vmul.f32 %v131, %v144
  %v149 = vmul.f32 %v132, %v144
  %v150 = vmul.f32 %v133, %v144
  %v151 = vmul.f32 %v134, %v144
  %v152 = vmul.f32 %v135, %v144
  %v153 = vmul.f32 %v136, %v144
  %v154 = vmul.f32 %v137, %v144
  %v155 = vmul.f32 %v138, %v144
  %v156 = vmul.f32 %v139, %v144
  %v157 = vmul.f32 %v140, %v144
  %v158 = vmul.f32 %v141, %v144
  %v159 = vmul.f32 %v142, %v144
  %v160 = vmul.f32 %v143, %v144
  %v161 = vadd.f32 %v112, %v145
  %v162 = vadd.f32 %v113, %v146
  %v163 = vadd.f32 %v114, %v147
  %v164 = vadd.f32 %v115, %v148
  %v165 = vadd.f32 %v116, %v149
  %v166 = vadd.f32 %v117, %v150
  %v167 = vadd.f32 %v118, %v151
  %v168 = vadd.f32 %v119, %v152
  %v169 = vadd.f32 %v120, %v153
  %v170 = vadd.f32 %v121, %v154
  %v171 = vadd.f32 %v122, %v155
  %v172 = vadd.f32 %v123, %v156
  %v173 = vadd.f32 %v124, %v157
  %v174 = vadd.f32 %v125, %v158
  %v175 = vadd.f32 %v126, %v159
  %v176 = vadd.f32 %v127, %v160
  %s177 = scalar_lea.vmem %s0, 576
  %v178 = vld [vmem:[%s177] sm:$0xff]
  %v179 = vld [vmem:[%s177 + $0x10] sm:$0xff]
  %v180 = vld [vmem:[%s177 + $0x20] sm:$0xff]
  %v181 = vld [vmem:[%s177 + $0x30] sm:$0xff]
  %v182 = vld [vmem:[%s177 + $0x40] sm:$0xff]
  %v183 = vld [vmem:[%s177 + $0x50] sm:$0xff]
  %v184 = vld [vmem:[%s177 + $0x60] sm:$0xff]
  %v185 = vld [vmem:[%s177 + $0x70] sm:$0xff]
  %v186 = vld [vmem:[%s177 + $0x90] sm:$0xff]
  %v187 = vld [vmem:[%s177 + $0xa0] sm:$0xff]
  %v188 = vld [vmem:[%s177 + $0xb0] sm:$0xff]
  %v189 = vld [vmem:[%s177 + $0xc0] sm:$0xff]
  %v190 = vld [vmem:[%s177 + $0xd0] sm:$0xff]
  %v191 = vld [vmem:[%s177 + $0xe0] sm:$0xff]
  %v192 = vld [vmem:[%s177 + $0xf0] sm:$0xff]
  %v193 = vld [vmem:[%s177 + $0x100] sm:$0xff]
  %v194 = vperm.slane %v27, 0
  %v195 = vmul.f32 %v178, %v194
  %v196 = vmul.f32 %v179, %v194
  %v197 = vmul.f32 %v180, %v194
  %v198 = vmul.f32 %v181, %v194
  %v199 = vmul.f32 %v182, %v194
  %v200 = vmul.f32 %v183, %v194
  %v201 = vmul.f32 %v184, %v194
  %v202 = vmul.f32 %v185, %v194
  %v203 = vmul.f32 %v186, %v194
  %v204 = vmul.f32 %v187, %v194
  %v205 = vmul.f32 %v188, %v194
  %v206 = vmul.f32 %v189, %v194
  %v207 = vmul.f32 %v190, %v194
  %v208 = vmul.f32 %v191, %v194
  %v209 = vmul.f32 %v192, %v194
  %v210 = vmul.f32 %v193, %v194
  %v211 = vadd.f32 %v161, %v195
  %v212 = vadd.f32 %v162, %v196
  %v213 = vadd.f32 %v163, %v197
  %v214 = vadd.f32 %v164, %v198
  %v215 = vadd.f32 %v165, %v199
  %v216 = vadd.f32 %v166, %v200
  %v217 = vadd.f32 %v167, %v201
  %v218 = vadd.f32 %v168, %v202
  %v219 = vadd.f32 %v169, %v203
  %v220 = vadd.f32 %v170, %v204
  %v221 = vadd.f32 %v171, %v205
  %v222 = vadd.f32 %v172, %v206
  %v223 = vadd.f32 %v173, %v207
  %v224 = vadd.f32 %v174, %v208
  %v225 = vadd.f32 %v175, %v209
  %v226 = vadd.f32 %v176, %v210
  %s227 = scalar_lea.vmem %s0, 864
  %v228 = vld [vmem:[%s227] sm:$0xff]
  %v229 = vld [vmem:[%s227 + $0x10] sm:$0xff]
  %v230 = vld [vmem:[%s227 + $0x20] sm:$0xff]
  %v231 = vld [vmem:[%s227 + $0x30] sm:$0xff]
  %v232 = vld [vmem:[%s227 + $0x40] sm:$0xff]
  %v233 = vld [vmem:[%s227 + $0x50] sm:$0xff]
  %v234 = vld [vmem:[%s227 + $0x60] sm:$0xff]
  %v235 = vld [vmem:[%s227 + $0x70] sm:$0xff]
  %v236 = vld [vmem:[%s227 + $0x90] sm:$0xff]
  %v237 = vld [vmem:[%s227 + $0xa0] sm:$0xff]
  %v238 = vld [vmem:[%s227 + $0xb0] sm:$0xff]
  %v239 = vld [vmem:[%s227 + $0xc0] sm:$0xff]
  %v240 = vld [vmem:[%s227 + $0xd0] sm:$0xff]
  %v241 = vld [vmem:[%s227 + $0xe0] sm:$0xff]
  %v242 = vld [vmem:[%s227 + $0xf0] sm:$0xff]
  %v243 = vld [vmem:[%s227 + $0x100] sm:$0xff]
  %v244 = vperm.slane %v27, 1
  %v245 = vmul.f32 %v228, %v244
  %v246 = vmul.f32 %v229, %v244
  %v247 = vmul.f32 %v230, %v244
  %v248 = vmul.f32 %v231, %v244
  %v249 = vmul.f32 %v232, %v244
  %v250 = vmul.f32 %v233, %v244
  %v251 = vmul.f32 %v234, %v244
  %v252 = vmul.f32 %v235, %v244
  %v253 = vmul.f32 %v236, %v244
  %v254 = vmul.f32 %v237, %v244
  %v255 = vmul.f32 %v238, %v244
  %v256 = vmul.f32 %v239, %v244
  %v257 = vmul.f32 %v240, %v244
  %v258 = vmul.f32 %v241, %v244
  %v259 = vmul.f32 %v242, %v244
  %v260 = vmul.f32 %v243, %v244
  %v261 = vadd.f32 %v211, %v245
  %v262 = vadd.f32 %v212, %v246
  %v263 = vadd.f32 %v213, %v247
  %v264 = vadd.f32 %v214, %v248
  %v265 = vadd.f32 %v215, %v249
  %v266 = vadd.f32 %v216, %v250
  %v267 = vadd.f32 %v217, %v251
  %v268 = vadd.f32 %v218, %v252
  %v269 = vadd.f32 %v219, %v253
  %v270 = vadd.f32 %v220, %v254
  %v271 = vadd.f32 %v221, %v255
  %v272 = vadd.f32 %v222, %v256
  %v273 = vadd.f32 %v223, %v257
  %v274 = vadd.f32 %v224, %v258
  %v275 = vadd.f32 %v225, %v259
  %v276 = vadd.f32 %v226, %v260
  %v277 = vld [vmem:[%s177 + $0x1] sm:$0xff]
  %v278 = vld [vmem:[%s177 + $0x11] sm:$0xff]
  %v279 = vld [vmem:[%s177 + $0x21] sm:$0xff]
  %v280 = vld [vmem:[%s177 + $0x31] sm:$0xff]
  %v281 = vld [vmem:[%s177 + $0x41] sm:$0xff]
  %v282 = vld [vmem:[%s177 + $0x51] sm:$0xff]
  %v283 = vld [vmem:[%s177 + $0x61] sm:$0xff]
  %v284 = vld [vmem:[%s177 + $0x71] sm:$0xff]
  %v285 = vld [vmem:[%s177 + $0x91] sm:$0xff]
  %v286 = vld [vmem:[%s177 + $0xa1] sm:$0xff]
  %v287 = vld [vmem:[%s177 + $0xb1] sm:$0xff]
  %v288 = vld [vmem:[%s177 + $0xc1] sm:$0xff]
  %v289 = vld [vmem:[%s177 + $0xd1] sm:$0xff]
  %v290 = vld [vmem:[%s177 + $0xe1] sm:$0xff]
  %v291 = vld [vmem:[%s177 + $0xf1] sm:$0xff]
  %v292 = vld [vmem:[%s177 + $0x101] sm:$0xff]
  %v293 = vperm.slane %v27, 2
  %v294 = vmul.f32 %v277, %v293
  %v295 = vmul.f32 %v278, %v293
  %v296 = vmul.f32 %v279, %v293
  %v297 = vmul.f32 %v280, %v293
  %v298 = vmul.f32 %v281, %v293
  %v299 = vmul.f32 %v282, %v293
  %v300 = vmul.f32 %v283, %v293
  %v301 = vmul.f32 %v284, %v293
  %v302 = vmul.f32 %v285, %v293
  %v303 = vmul.f32 %v286, %v293
  %v304 = vmul.f32 %v287, %v293
  %v305 = vmul.f32 %v288, %v293
  %v306 = vmul.f32 %v289, %v293
  %v307 = vmul.f32 %v290, %v293
  %v308 = vmul.f32 %v291, %v293
  %v309 = vmul.f32 %v292, %v293
  %v310 = vadd.f32 %v261, %v294
  %v311 = vadd.f32 %v262, %v295
  %v312 = vadd.f32 %v263, %v296
  %v313 = vadd.f32 %v264, %v297
  %v314 = vadd.f32 %v265, %v298
  %v315 = vadd.f32 %v266, %v299
  %v316 = vadd.f32 %v267, %v300
  %v317 = vadd.f32 %v268, %v301
  %v318 = vadd.f32 %v269, %v302
  %v319 = vadd.f32 %v270, %v303
  %v320 = vadd.f32 %v271, %v304
  %v321 = vadd.f32 %v272, %v305
  %v322 = vadd.f32 %v273, %v306
  %v323 = vadd.f32 %v274, %v307
  %v324 = vadd.f32 %v275, %v308
  %v325 = vadd.f32 %v276, %v309
  %s326 = scalar_lea.vmem %s0, 16
  %v327 = vld [vmem:[%s326] sm:$0xff]
  %v328 = vld [vmem:[%s326 + $0x10] sm:$0xff]
  %v329 = vld [vmem:[%s326 + $0x20] sm:$0xff]
  %v330 = vld [vmem:[%s326 + $0x30] sm:$0xff]
  %v331 = vld [vmem:[%s326 + $0x40] sm:$0xff]
  %v332 = vld [vmem:[%s326 + $0x50] sm:$0xff]
  %v333 = vld [vmem:[%s326 + $0x60] sm:$0xff]
  %v334 = vld [vmem:[%s326 + $0x70] sm:$0xff]
  %v335 = vld [vmem:[%s326 + $0x90] sm:$0xff]
  %v336 = vld [vmem:[%s326 + $0xa0] sm:$0xff]
  %v337 = vld [vmem:[%s326 + $0xb0] sm:$0xff]
  %v338 = vld [vmem:[%s326 + $0xc0] sm:$0xff]
  %v339 = vld [vmem:[%s326 + $0xd0] sm:$0xff]
  %v340 = vld [vmem:[%s326 + $0xe0] sm:$0xff]
  %v341 = vld [vmem:[%s326 + $0xf0] sm:$0xff]
  %v342 = vld [vmem:[%s326 + $0x100] sm:$0xff]
  %v343 = vperm.slane %v28, 0
  %v344 = vmul.f32 %v327, %v343
  %v345 = vmul.f32 %v328, %v343
  %v346 = vmul.f32 %v329, %v343
  %v347 = vmul.f32 %v330, %v343
  %v348 = vmul.f32 %v331, %v343
  %v349 = vmul.f32 %v332, %v343
  %v350 = vmul.f32 %v333, %v343
  %v351 = vmul.f32 %v334, %v343
  %v352 = vmul.f32 %v335, %v343
  %v353 = vmul.f32 %v336, %v343
  %v354 = vmul.f32 %v337, %v343
  %v355 = vmul.f32 %v338, %v343
  %v356 = vmul.f32 %v339, %v343
  %v357 = vmul.f32 %v340, %v343
  %v358 = vmul.f32 %v341, %v343
  %v359 = vmul.f32 %v342, %v343
  %v360 = vadd.f32 %v310, %v344
  %v361 = vadd.f32 %v311, %v345
  %v362 = vadd.f32 %v312, %v346
  %v363 = vadd.f32 %v313, %v347
  %v364 = vadd.f32 %v314, %v348
  %v365 = vadd.f32 %v315, %v349
  %v366 = vadd.f32 %v316, %v350
  %v367 = vadd.f32 %v317, %v351
  %v368 = vadd.f32 %v318, %v352
  %v369 = vadd.f32 %v319, %v353
  %v370 = vadd.f32 %v320, %v354
  %v371 = vadd.f32 %v321, %v355
  %v372 = vadd.f32 %v322, %v356
  %v373 = vadd.f32 %v323, %v357
  %v374 = vadd.f32 %v324, %v358
  %v375 = vadd.f32 %v325, %v359
  %s376 = scalar_lea.vmem %s0, 304
  %v377 = vld [vmem:[%s376] sm:$0xff]
  %v378 = vld [vmem:[%s376 + $0x10] sm:$0xff]
  %v379 = vld [vmem:[%s376 + $0x20] sm:$0xff]
  %v380 = vld [vmem:[%s376 + $0x30] sm:$0xff]
  %v381 = vld [vmem:[%s376 + $0x40] sm:$0xff]
  %v382 = vld [vmem:[%s376 + $0x50] sm:$0xff]
  %v383 = vld [vmem:[%s376 + $0x60] sm:$0xff]
  %v384 = vld [vmem:[%s376 + $0x70] sm:$0xff]
  %v385 = vld [vmem:[%s376 + $0x90] sm:$0xff]
  %v386 = vld [vmem:[%s376 + $0xa0] sm:$0xff]
  %v387 = vld [vmem:[%s376 + $0xb0] sm:$0xff]
  %v388 = vld [vmem:[%s376 + $0xc0] sm:$0xff]
  %v389 = vld [vmem:[%s376 + $0xd0] sm:$0xff]
  %v390 = vld [vmem:[%s376 + $0xe0] sm:$0xff]
  %v391 = vld [vmem:[%s376 + $0xf0] sm:$0xff]
  %v392 = vld [vmem:[%s376 + $0x100] sm:$0xff]
  %v393 = vperm.slane %v28, 1
  %v394 = vmul.f32 %v377, %v393
  %v395 = vmul.f32 %v378, %v393
  %v396 = vmul.f32 %v379, %v393
  %v397 = vmul.f32 %v380, %v393
  %v398 = vmul.f32 %v381, %v393
  %v399 = vmul.f32 %v382, %v393
  %v400 = vmul.f32 %v383, %v393
  %v401 = vmul.f32 %v384, %v393
  %v402 = vmul.f32 %v385, %v393
  %v403 = vmul.f32 %v386, %v393
  %v404 = vmul.f32 %v387, %v393
  %v405 = vmul.f32 %v388, %v393
  %v406 = vmul.f32 %v389, %v393
  %v407 = vmul.f32 %v390, %v393
  %v408 = vmul.f32 %v391, %v393
  %v409 = vmul.f32 %v392, %v393
  %v410 = vadd.f32 %v360, %v394
  %v411 = vadd.f32 %v361, %v395
  %v412 = vadd.f32 %v362, %v396
  %v413 = vadd.f32 %v363, %v397
  %v414 = vadd.f32 %v364, %v398
  %v415 = vadd.f32 %v365, %v399
  %v416 = vadd.f32 %v366, %v400
  %v417 = vadd.f32 %v367, %v401
  %v418 = vadd.f32 %v368, %v402
  %v419 = vadd.f32 %v369, %v403
  %v420 = vadd.f32 %v370, %v404
  %v421 = vadd.f32 %v371, %v405
  %v422 = vadd.f32 %v372, %v406
  %v423 = vadd.f32 %v373, %v407
  %v424 = vadd.f32 %v374, %v408
  %v425 = vadd.f32 %v375, %v409
  %v426 = vld [vmem:[%s326 + $0x1] sm:$0xff]
  %v427 = vld [vmem:[%s326 + $0x11] sm:$0xff]
  %v428 = vld [vmem:[%s326 + $0x21] sm:$0xff]
  %v429 = vld [vmem:[%s326 + $0x31] sm:$0xff]
  %v430 = vld [vmem:[%s326 + $0x41] sm:$0xff]
  %v431 = vld [vmem:[%s326 + $0x51] sm:$0xff]
  %v432 = vld [vmem:[%s326 + $0x61] sm:$0xff]
  %v433 = vld [vmem:[%s326 + $0x71] sm:$0xff]
  %v434 = vld [vmem:[%s326 + $0x91] sm:$0xff]
  %v435 = vld [vmem:[%s326 + $0xa1] sm:$0xff]
  %v436 = vld [vmem:[%s326 + $0xb1] sm:$0xff]
  %v437 = vld [vmem:[%s326 + $0xc1] sm:$0xff]
  %v438 = vld [vmem:[%s326 + $0xd1] sm:$0xff]
  %v439 = vld [vmem:[%s326 + $0xe1] sm:$0xff]
  %v440 = vld [vmem:[%s326 + $0xf1] sm:$0xff]
  %v441 = vld [vmem:[%s326 + $0x101] sm:$0xff]
  %v442 = vperm.slane %v28, 2
  %v443 = vmul.f32 %v426, %v442
  %v444 = vmul.f32 %v427, %v442
  %v445 = vmul.f32 %v428, %v442
  %v446 = vmul.f32 %v429, %v442
  %v447 = vmul.f32 %v430, %v442
  %v448 = vmul.f32 %v431, %v442
  %v449 = vmul.f32 %v432, %v442
  %v450 = vmul.f32 %v433, %v442
  %v451 = vmul.f32 %v434, %v442
  %v452 = vmul.f32 %v435, %v442
  %v453 = vmul.f32 %v436, %v442
  %v454 = vmul.f32 %v437, %v442
  %v455 = vmul.f32 %v438, %v442
  %v456 = vmul.f32 %v439, %v442
  %v457 = vmul.f32 %v440, %v442
  %v458 = vmul.f32 %v441, %v442
  %v459 = vadd.f32 %v410, %v443
  %v460 = vadd.f32 %v411, %v444
  %v461 = vadd.f32 %v412, %v445
  %v462 = vadd.f32 %v413, %v446
  %v463 = vadd.f32 %v414, %v447
  %v464 = vadd.f32 %v415, %v448
  %v465 = vadd.f32 %v416, %v449
  %v466 = vadd.f32 %v417, %v450
  %v467 = vadd.f32 %v418, %v451
  %v468 = vadd.f32 %v419, %v452
  %v469 = vadd.f32 %v420, %v453
  %v470 = vadd.f32 %v421, %v454
  %v471 = vadd.f32 %v422, %v455
  %v472 = vadd.f32 %v423, %v456
  %v473 = vadd.f32 %v424, %v457
  %v474 = vadd.f32 %v425, %v458
  %v475 = vld [vmem:[%s2] sm:$0xff]
  %v476 = vld [vmem:[%s2 + $0x8] sm:$0xff]
  %v477 = vld [vmem:[%s2 + $0x10] sm:$0xff]
  %v478 = vld [vmem:[%s2 + $0x18] sm:$0xff]
  %v479 = vld [vmem:[%s3] sm:$0x1]
  %v481 = vperm.slane %v479, 0
  %vm483 = vcmask 130048
  %v485 = vsel %vm483, %v459, 0
  %v488 = vsel %vm483, %v460, 0
  %v491 = vsel %vm483, %v461, 0
  %v494 = vsel %vm483, %v462, 0
  %v497 = vsel %vm483, %v463, 0
  %v500 = vsel %vm483, %v464, 0
  %v503 = vsel %vm483, %v465, 0
  %v506 = vsel %vm483, %v466, 0
  %v509 = vsel %vm483, %v467, 0
  %v512 = vsel %vm483, %v468, 0
  %v515 = vsel %vm483, %v469, 0
  %v518 = vsel %vm483, %v470, 0
  %v521 = vsel %vm483, %v471, 0
  %v524 = vsel %vm483, %v472, 0
  %v527 = vsel %vm483, %v473, 0
  %v530 = vsel %vm483, %v474, 0
  %v533 = vsel %vm483, %v475, 0
  %v536 = vsel %vm483, %v476, 0
  %v539 = vsel %vm483, %v477, 0
  %v542 = vsel %vm483, %v478, 0
  %544 = vmatpush.xpose.msra.mxu0 0.0
  %545 = vmatpush.xpose.msra.mxu0 0.0
  %546 = vmatpush.xpose.msra.mxu0 0.0
  %547 = vmatpush.xpose.msra.mxu0 0.0
  %548 = vmatpush.xpose.msra.mxu0 0.0
  %549 = vmatpush.xpose.msra.mxu0 0.0
  %550 = vmatpush.xpose.msra.mxu0 0.0
  %551 = vmatpush.xpose.msra.mxu0 0.0
  %552 = vmatpush.xpose.msra.mxu0 0.0
  %553 = vmatpush.xpose.msra.mxu0 0.0
  %554 = vmatpush.xpose.msra.mxu0 0.0
  %555 = vmatpush.xpose.msra.mxu0 0.0
  %556 = vmatpush.xpose.msra.mxu0 %v542
  %557 = vmatpush.xpose.msra.mxu0 %v539
  %558 = vmatpush.xpose.msra.mxu0 %v536
  %559 = vmatpush.xpose.msra.mxu0 %v533
  %560 = vmatmul.f32.gmra.mxu0 %v485
  %v561 = vpop.f32.mrf.mxu0
  %v562 = vadd.f32 %v481, %v561
  %563 = vmatmul.f32.gmra.mxu0 %v488
  %v564 = vpop.f32.mrf.mxu0
  %v565 = vadd.f32 %v481, %v564
  %566 = vmatmul.f32.gmra.mxu0 %v491
  %v567 = vpop.f32.mrf.mxu0
  %v568 = vadd.f32 %v481, %v567
  %569 = vmatmul.f32.gmra.mxu0 %v494
  %v570 = vpop.f32.mrf.mxu0
  %v571 = vadd.f32 %v481, %v570
  %572 = vmatmul.f32.gmra.mxu0 %v497
  %v573 = vpop.f32.mrf.mxu0
  %v574 = vadd.f32 %v481, %v573
  %575 = vmatmul.f32.gmra.mxu0 %v500
  %v576 = vpop.f32.mrf.mxu0
  %v577 = vadd.f32 %v481, %v576
  %578 = vmatmul.f32.gmra.mxu0 %v503
  %v579 = vpop.f32.mrf.mxu0
  %v580 = vadd.f32 %v481, %v579
  %581 = vmatmul.f32.gmra.mxu0 %v506
  %v582 = vpop.f32.mrf.mxu0
  %v583 = vadd.f32 %v481, %v582
  %584 = vmatmul.f32.gmra.mxu0 %v509
  %v585 = vpop.f32.mrf.mxu0
  %v586 = vadd.f32 %v481, %v585
  %587 = vmatmul.f32.gmra.mxu0 %v512
  %v588 = vpop.f32.mrf.mxu0
  %v589 = vadd.f32 %v481, %v588
  %590 = vmatmul.f32.gmra.mxu0 %v515
  %v591 = vpop.f32.mrf.mxu0
  %v592 = vadd.f32 %v481, %v591
  %593 = vmatmul.f32.gmra.mxu0 %v518
  %v594 = vpop.f32.mrf.mxu0
  %v595 = vadd.f32 %v481, %v594
  %596 = vmatmul.f32.gmra.mxu0 %v521
  %v597 = vpop.f32.mrf.mxu0
  %v598 = vadd.f32 %v481, %v597
  %599 = vmatmul.f32.gmra.mxu0 %v524
  %v600 = vpop.f32.mrf.mxu0
  %v601 = vadd.f32 %v481, %v600
  %602 = vmatmul.f32.gmra.mxu0 %v527
  %v603 = vpop.f32.mrf.mxu0
  %v604 = vadd.f32 %v481, %v603
  %605 = vmatmul.f32.gmra.mxu0 %v530
  %v606 = vpop.f32.mrf.mxu0
  %v607 = vadd.f32 %v481, %v606
  %608 = vdwg.mxu0
  %v609 = vmax.f32 %v562, 0.0
  %v610 = vmax.f32 %v565, 0.0
  %v611 = vmax.f32 %v568, 0.0
  %v612 = vmax.f32 %v571, 0.0
  %v613 = vmax.f32 %v574, 0.0
  %v614 = vmax.f32 %v577, 0.0
  %v615 = vmax.f32 %v580, 0.0
  %v616 = vmax.f32 %v583, 0.0
  %v617 = vmax.f32 %v586, 0.0
  %v618 = vmax.f32 %v589, 0.0
  %v619 = vmax.f32 %v592, 0.0
  %v620 = vmax.f32 %v595, 0.0
  %v621 = vmax.f32 %v598, 0.0
  %v622 = vmax.f32 %v601, 0.0
  %v623 = vmax.f32 %v604, 0.0
  %v624 = vmax.f32 %v607, 0.0
  %vm625 = vcmask 261120
  %626 = vst.msk [vmem:[#allocation2] sm:$0xff] %vm625, 0.0
  %vm627 = vcmask 254976
  %628 = vst.msk [vmem:[#allocation2 + $0x8] sm:$0x3] %vm627, 0.0
  %629 = vst.msk [vmem:[#allocation2 + $0xa0] sm:$0xff] %vm625, 0.0
  %630 = vst.msk [vmem:[#allocation2 + $0xa8] sm:$0x3] %vm627, 0.0
  %s631 = scalar_lea.vmem [#allocation2], 144
  %632 = vst.msk [vmem:[%s631] sm:$0xff] %vm625, 0.0
  %633 = vst.msk [vmem:[%s631 + $0x8] sm:$0x3] %vm627, 0.0
  %634 = vst.msk [vmem:[%s631 + $0xa0] sm:$0xff] %vm625, 0.0
  %635 = vst.msk [vmem:[%s631 + $0xa8] sm:$0x3] %vm627, 0.0
  %s636 = scalar_lea.vmem [#allocation2], 16
  %vm637 = vcmask 253952
  %638 = vst.msk [vmem:[%s636] sm:$0x1] %vm637, 0.0
  %639 = vst.msk [vmem:[%s636 + $0x10] sm:$0x1] %vm637, 0.0
  %640 = vst.msk [vmem:[%s636 + $0x20] sm:$0x1] %vm637, 0.0
  %641 = vst.msk [vmem:[%s636 + $0x30] sm:$0x1] %vm637, 0.0
  %642 = vst.msk [vmem:[%s636 + $0x40] sm:$0x1] %vm637, 0.0
  %643 = vst.msk [vmem:[%s636 + $0x50] sm:$0x1] %vm637, 0.0
  %644 = vst.msk [vmem:[%s636 + $0x60] sm:$0x1] %vm637, 0.0
  %645 = vst.msk [vmem:[%s636 + $0x70] sm:$0x1] %vm637, 0.0
  %646 = vst.msk [vmem:[%s636 + $0xa0] sm:$0x1] %vm637, 0.0
  %647 = vst.msk [vmem:[%s636 + $0xb0] sm:$0x1] %vm637, 0.0
  %648 = vst.msk [vmem:[%s636 + $0xc0] sm:$0x1] %vm637, 0.0
  %649 = vst.msk [vmem:[%s636 + $0xd0] sm:$0x1] %vm637, 0.0
  %650 = vst.msk [vmem:[%s636 + $0xe0] sm:$0x1] %vm637, 0.0
  %651 = vst.msk [vmem:[%s636 + $0xf0] sm:$0x1] %vm637, 0.0
  %652 = vst.msk [vmem:[%s636 + $0x100] sm:$0x1] %vm637, 0.0
  %653 = vst.msk [vmem:[%s636 + $0x110] sm:$0x1] %vm637, 0.0
  %654 = vst.msk [vmem:[%s636 + $0x9] sm:$0x1] %vm637, 0.0
  %655 = vst.msk [vmem:[%s636 + $0x19] sm:$0x1] %vm637, 0.0
  %656 = vst.msk [vmem:[%s636 + $0x29] sm:$0x1] %vm637, 0.0
  %657 = vst.msk [vmem:[%s636 + $0x39] sm:$0x1] %vm637, 0.0
  %658 = vst.msk [vmem:[%s636 + $0x49] sm:$0x1] %vm637, 0.0
  %659 = vst.msk [vmem:[%s636 + $0x59] sm:$0x1] %vm637, 0.0
  %660 = vst.msk [vmem:[%s636 + $0x69] sm:$0x1] %vm637, 0.0
  %661 = vst.msk [vmem:[%s636 + $0x79] sm:$0x1] %vm637, 0.0
  %662 = vst.msk [vmem:[%s636 + $0xa9] sm:$0x1] %vm637, 0.0
  %663 = vst.msk [vmem:[%s636 + $0xb9] sm:$0x1] %vm637, 0.0
  %664 = vst.msk [vmem:[%s636 + $0xc9] sm:$0x1] %vm637, 0.0
  %665 = vst.msk [vmem:[%s636 + $0xd9] sm:$0x1] %vm637, 0.0
  %666 = vst.msk [vmem:[%s636 + $0xe9] sm:$0x1] %vm637, 0.0
  %667 = vst.msk [vmem:[%s636 + $0xf9] sm:$0x1] %vm637, 0.0
  %668 = vst.msk [vmem:[%s636 + $0x109] sm:$0x1] %vm637, 0.0
  %669 = vst.msk [vmem:[%s636 + $0x119] sm:$0x1] %vm637, 0.0
  %670 = vst.msk [vmem:[%s636 + $0x1] sm:$0xff] %vm625, %v609
  %671 = vst.msk [vmem:[%s636 + $0x11] sm:$0xff] %vm625, %v610
  %672 = vst.msk [vmem:[%s636 + $0x21] sm:$0xff] %vm625, %v611
  %673 = vst.msk [vmem:[%s636 + $0x31] sm:$0xff] %vm625, %v612
  %674 = vst.msk [vmem:[%s636 + $0x41] sm:$0xff] %vm625, %v613
  %675 = vst.msk [vmem:[%s636 + $0x51] sm:$0xff] %vm625, %v614
  %676 = vst.msk [vmem:[%s636 + $0x61] sm:$0xff] %vm625, %v615
  %677 = vst.msk [vmem:[%s636 + $0x71] sm:$0xff] %vm625, %v616
  %678 = vst.msk [vmem:[%s636 + $0xa1] sm:$0xff] %vm625, %v617
  %679 = vst.msk [vmem:[%s636 + $0xb1] sm:$0xff] %vm625, %v618
  %680 = vst.msk [vmem:[%s636 + $0xc1] sm:$0xff] %vm625, %v619
  %681 = vst.msk [vmem:[%s636 + $0xd1] sm:$0xff] %vm625, %v620
  %682 = vst.msk [vmem:[%s636 + $0xe1] sm:$0xff] %vm625, %v621
  %683 = vst.msk [vmem:[%s636 + $0xf1] sm:$0xff] %vm625, %v622
  %684 = vst.msk [vmem:[%s636 + $0x101] sm:$0xff] %vm625, %v623
  %685 = vst.msk [vmem:[%s636 + $0x111] sm:$0xff] %vm625, %v624
  %v686 = vld [vmem:[%s4] sm:$0x7]
  %v687 = vld [vmem:[%s4 + $0x4] sm:$0x7]
  %v688 = vld [vmem:[%s4 + $0x8] sm:$0x7]
  %v689 = vld [vmem:[#allocation2] sm:$0xff]
  %v690 = vld [vmem:[#allocation2 + $0x10] sm:$0xff]
  %v691 = vld [vmem:[#allocation2 + $0x20] sm:$0xff]
  %v692 = vld [vmem:[#allocation2 + $0x30] sm:$0xff]
  %v693 = vld [vmem:[#allocation2 + $0x40] sm:$0xff]
  %v694 = vld [vmem:[#allocation2 + $0x50] sm:$0xff]
  %v695 = vld [vmem:[#allocation2 + $0x60] sm:$0xff]
  %v696 = vld [vmem:[#allocation2 + $0x70] sm:$0xff]
  %v697 = vld [vmem:[#allocation2 + $0xa0] sm:$0xff]
  %v698 = vld [vmem:[#allocation2 + $0xb0] sm:$0xff]
  %v699 = vld [vmem:[#allocation2 + $0xc0] sm:$0xff]
  %v700 = vld [vmem:[#allocation2 + $0xd0] sm:$0xff]
  %v701 = vld [vmem:[#allocation2 + $0xe0] sm:$0xff]
  %v702 = vld [vmem:[#allocation2 + $0xf0] sm:$0xff]
  %v703 = vld [vmem:[#allocation2 + $0x100] sm:$0xff]
  %v704 = vld [vmem:[#allocation2 + $0x110] sm:$0xff]
  %v705 = vperm.slane %v686, 0
  %v706 = vmul.f32 %v689, %v705
  %v707 = vmul.f32 %v690, %v705
  %v708 = vmul.f32 %v691, %v705
  %v709 = vmul.f32 %v692, %v705
  %v710 = vmul.f32 %v693, %v705
  %v711 = vmul.f32 %v694, %v705
  %v712 = vmul.f32 %v695, %v705
  %v713 = vmul.f32 %v696, %v705
  %v714 = vmul.f32 %v697, %v705
  %v715 = vmul.f32 %v698, %v705
  %v716 = vmul.f32 %v699, %v705
  %v717 = vmul.f32 %v700, %v705
  %v718 = vmul.f32 %v701, %v705
  %v719 = vmul.f32 %v702, %v705
  %v720 = vmul.f32 %v703, %v705
  %v721 = vmul.f32 %v704, %v705
  %v722 = vadd.f32 %v706, 0.0
  %v723 = vadd.f32 %v707, 0.0
  %v724 = vadd.f32 %v708, 0.0
  %v725 = vadd.f32 %v709, 0.0
  %v726 = vadd.f32 %v710, 0.0
  %v727 = vadd.f32 %v711, 0.0
  %v728 = vadd.f32 %v712, 0.0
  %v729 = vadd.f32 %v713, 0.0
  %v730 = vadd.f32 %v714, 0.0
  %v731 = vadd.f32 %v715, 0.0
  %v732 = vadd.f32 %v716, 0.0
  %v733 = vadd.f32 %v717, 0.0
  %v734 = vadd.f32 %v718, 0.0
  %v735 = vadd.f32 %v719, 0.0
  %v736 = vadd.f32 %v720, 0.0
  %v737 = vadd.f32 %v721, 0.0
  %v738 = vld [vmem:[#allocation2 + $0x1] sm:$0xff]
  %v739 = vld [vmem:[#allocation2 + $0x11] sm:$0xff]
  %v740 = vld [vmem:[#allocation2 + $0x21] sm:$0xff]
  %v741 = vld [vmem:[#allocation2 + $0x31] sm:$0xff]
  %v742 = vld [vmem:[#allocation2 + $0x41] sm:$0xff]
  %v743 = vld [vmem:[#allocation2 + $0x51] sm:$0xff]
  %v744 = vld [vmem:[#allocation2 + $0x61] sm:$0xff]
  %v745 = vld [vmem:[#allocation2 + $0x71] sm:$0xff]
  %v746 = vld [vmem:[#allocation2 + $0xa1] sm:$0xff]
  %v747 = vld [vmem:[#allocation2 + $0xb1] sm:$0xff]
  %v748 = vld [vmem:[#allocation2 + $0xc1] sm:$0xff]
  %v749 = vld [vmem:[#allocation2 + $0xd1] sm:$0xff]
  %v750 = vld [vmem:[#allocation2 + $0xe1] sm:$0xff]
  %v751 = vld [vmem:[#allocation2 + $0xf1] sm:$0xff]
  %v752 = vld [vmem:[#allocation2 + $0x101] sm:$0xff]
  %v753 = vld [vmem:[#allocation2 + $0x111] sm:$0xff]
  %v754 = vperm.slane %v686, 1
  %v755 = vmul.f32 %v738, %v754
  %v756 = vmul.f32 %v739, %v754
  %v757 = vmul.f32 %v740, %v754
  %v758 = vmul.f32 %v741, %v754
  %v759 = vmul.f32 %v742, %v754
  %v760 = vmul.f32 %v743, %v754
  %v761 = vmul.f32 %v744, %v754
  %v762 = vmul.f32 %v745, %v754
  %v763 = vmul.f32 %v746, %v754
  %v764 = vmul.f32 %v747, %v754
  %v765 = vmul.f32 %v748, %v754
  %v766 = vmul.f32 %v749, %v754
  %v767 = vmul.f32 %v750, %v754
  %v768 = vmul.f32 %v751, %v754
  %v769 = vmul.f32 %v752, %v754
  %v770 = vmul.f32 %v753, %v754
  %v771 = vadd.f32 %v722, %v755
  %v772 = vadd.f32 %v723, %v756
  %v773 = vadd.f32 %v724, %v757
  %v774 = vadd.f32 %v725, %v758
  %v775 = vadd.f32 %v726, %v759
  %v776 = vadd.f32 %v727, %v760
  %v777 = vadd.f32 %v728, %v761
  %v778 = vadd.f32 %v729, %v762
  %v779 = vadd.f32 %v730, %v763
  %v780 = vadd.f32 %v731, %v764
  %v781 = vadd.f32 %v732, %v765
  %v782 = vadd.f32 %v733, %v766
  %v783 = vadd.f32 %v734, %v767
  %v784 = vadd.f32 %v735, %v768
  %v785 = vadd.f32 %v736, %v769
  %v786 = vadd.f32 %v737, %v770
  %v787 = vld [vmem:[#allocation2 + $0x2] sm:$0xff]
  %v788 = vld [vmem:[#allocation2 + $0x12] sm:$0xff]
  %v789 = vld [vmem:[#allocation2 + $0x22] sm:$0xff]
  %v790 = vld [vmem:[#allocation2 + $0x32] sm:$0xff]
  %v791 = vld [vmem:[#allocation2 + $0x42] sm:$0xff]
  %v792 = vld [vmem:[#allocation2 + $0x52] sm:$0xff]
  %v793 = vld [vmem:[#allocation2 + $0x62] sm:$0xff]
  %v794 = vld [vmem:[#allocation2 + $0x72] sm:$0xff]
  %v795 = vld [vmem:[#allocation2 + $0xa2] sm:$0xff]
  %v796 = vld [vmem:[#allocation2 + $0xb2] sm:$0xff]
  %v797 = vld [vmem:[#allocation2 + $0xc2] sm:$0xff]
  %v798 = vld [vmem:[#allocation2 + $0xd2] sm:$0xff]
  %v799 = vld [vmem:[#allocation2 + $0xe2] sm:$0xff]
  %v800 = vld [vmem:[#allocation2 + $0xf2] sm:$0xff]
  %v801 = vld [vmem:[#allocation2 + $0x102] sm:$0xff]
  %v802 = vld [vmem:[#allocation2 + $0x112] sm:$0xff]
  %v803 = vperm.slane %v686, 2
  %v804 = vmul.f32 %v787, %v803
  %v805 = vmul.f32 %v788, %v803
  %v806 = vmul.f32 %v789, %v803
  %v807 = vmul.f32 %v790, %v803
  %v808 = vmul.f32 %v791, %v803
  %v809 = vmul.f32 %v792, %v803
  %v810 = vmul.f32 %v793, %v803
  %v811 = vmul.f32 %v794, %v803
  %v812 = vmul.f32 %v795, %v803
  %v813 = vmul.f32 %v796, %v803
  %v814 = vmul.f32 %v797, %v803
  %v815 = vmul.f32 %v798, %v803
  %v816 = vmul.f32 %v799, %v803
  %v817 = vmul.f32 %v800, %v803
  %v818 = vmul.f32 %v801, %v803
  %v819 = vmul.f32 %v802, %v803
  %v820 = vadd.f32 %v771, %v804
  %v821 = vadd.f32 %v772, %v805
  %v822 = vadd.f32 %v773, %v806
  %v823 = vadd.f32 %v774, %v807
  %v824 = vadd.f32 %v775, %v808
  %v825 = vadd.f32 %v776, %v809
  %v826 = vadd.f32 %v777, %v810
  %v827 = vadd.f32 %v778, %v811
  %v828 = vadd.f32 %v779, %v812
  %v829 = vadd.f32 %v780, %v813
  %v830 = vadd.f32 %v781, %v814
  %v831 = vadd.f32 %v782, %v815
  %v832 = vadd.f32 %v783, %v816
  %v833 = vadd.f32 %v784, %v817
  %v834 = vadd.f32 %v785, %v818
  %v835 = vadd.f32 %v786, %v819
  %v836 = vld [vmem:[%s636] sm:$0xff]
  %v837 = vld [vmem:[%s636 + $0x10] sm:$0xff]
  %v838 = vld [vmem:[%s636 + $0x20] sm:$0xff]
  %v839 = vld [vmem:[%s636 + $0x30] sm:$0xff]
  %v840 = vld [vmem:[%s636 + $0x40] sm:$0xff]
  %v841 = vld [vmem:[%s636 + $0x50] sm:$0xff]
  %v842 = vld [vmem:[%s636 + $0x60] sm:$0xff]
  %v843 = vld [vmem:[%s636 + $0x70] sm:$0xff]
  %v844 = vld [vmem:[%s636 + $0xa0] sm:$0xff]
  %v845 = vld [vmem:[%s636 + $0xb0] sm:$0xff]
  %v846 = vld [vmem:[%s636 + $0xc0] sm:$0xff]
  %v847 = vld [vmem:[%s636 + $0xd0] sm:$0xff]
  %v848 = vld [vmem:[%s636 + $0xe0] sm:$0xff]
  %v849 = vld [vmem:[%s636 + $0xf0] sm:$0xff]
  %v850 = vld [vmem:[%s636 + $0x100] sm:$0xff]
  %v851 = vld [vmem:[%s636 + $0x110] sm:$0xff]
  %v852 = vperm.slane %v687, 0
  %v853 = vmul.f32 %v836, %v852
  %v854 = vmul.f32 %v837, %v852
  %v855 = vmul.f32 %v838, %v852
  %v856 = vmul.f32 %v839, %v852
  %v857 = vmul.f32 %v840, %v852
  %v858 = vmul.f32 %v841, %v852
  %v859 = vmul.f32 %v842, %v852
  %v860 = vmul.f32 %v843, %v852
  %v861 = vmul.f32 %v844, %v852
  %v862 = vmul.f32 %v845, %v852
  %v863 = vmul.f32 %v846, %v852
  %v864 = vmul.f32 %v847, %v852
  %v865 = vmul.f32 %v848, %v852
  %v866 = vmul.f32 %v849, %v852
  %v867 = vmul.f32 %v850, %v852
  %v868 = vmul.f32 %v851, %v852
  %v869 = vadd.f32 %v820, %v853
  %v870 = vadd.f32 %v821, %v854
  %v871 = vadd.f32 %v822, %v855
  %v872 = vadd.f32 %v823, %v856
  %v873 = vadd.f32 %v824, %v857
  %v874 = vadd.f32 %v825, %v858
  %v875 = vadd.f32 %v826, %v859
  %v876 = vadd.f32 %v827, %v860
  %v877 = vadd.f32 %v828, %v861
  %v878 = vadd.f32 %v829, %v862
  %v879 = vadd.f32 %v830, %v863
  %v880 = vadd.f32 %v831, %v864
  %v881 = vadd.f32 %v832, %v865
  %v882 = vadd.f32 %v833, %v866
  %v883 = vadd.f32 %v834, %v867
  %v884 = vadd.f32 %v835, %v868
  %v885 = vld [vmem:[%s636 + $0x1] sm:$0xff]
  %v886 = vld [vmem:[%s636 + $0x11] sm:$0xff]
  %v887 = vld [vmem:[%s636 + $0x21] sm:$0xff]
  %v888 = vld [vmem:[%s636 + $0x31] sm:$0xff]
  %v889 = vld [vmem:[%s636 + $0x41] sm:$0xff]
  %v890 = vld [vmem:[%s636 + $0x51] sm:$0xff]
  %v891 = vld [vmem:[%s636 + $0x61] sm:$0xff]
  %v892 = vld [vmem:[%s636 + $0x71] sm:$0xff]
  %v893 = vld [vmem:[%s636 + $0xa1] sm:$0xff]
  %v894 = vld [vmem:[%s636 + $0xb1] sm:$0xff]
  %v895 = vld [vmem:[%s636 + $0xc1] sm:$0xff]
  %v896 = vld [vmem:[%s636 + $0xd1] sm:$0xff]
  %v897 = vld [vmem:[%s636 + $0xe1] sm:$0xff]
  %v898 = vld [vmem:[%s636 + $0xf1] sm:$0xff]
  %v899 = vld [vmem:[%s636 + $0x101] sm:$0xff]
  %v900 = vld [vmem:[%s636 + $0x111] sm:$0xff]
  %v901 = vperm.slane %v687, 1
  %v902 = vmul.f32 %v885, %v901
  %v903 = vmul.f32 %v886, %v901
  %v904 = vmul.f32 %v887, %v901
  %v905 = vmul.f32 %v888, %v901
  %v906 = vmul.f32 %v889, %v901
  %v907 = vmul.f32 %v890, %v901
  %v908 = vmul.f32 %v891, %v901
  %v909 = vmul.f32 %v892, %v901
  %v910 = vmul.f32 %v893, %v901
  %v911 = vmul.f32 %v894, %v901
  %v912 = vmul.f32 %v895, %v901
  %v913 = vmul.f32 %v896, %v901
  %v914 = vmul.f32 %v897, %v901
  %v915 = vmul.f32 %v898, %v901
  %v916 = vmul.f32 %v899, %v901
  %v917 = vmul.f32 %v900, %v901
  %v918 = vadd.f32 %v869, %v902
  %v919 = vadd.f32 %v870, %v903
  %v920 = vadd.f32 %v871, %v904
  %v921 = vadd.f32 %v872, %v905
  %v922 = vadd.f32 %v873, %v906
  %v923 = vadd.f32 %v874, %v907
  %v924 = vadd.f32 %v875, %v908
  %v925 = vadd.f32 %v876, %v909
  %v926 = vadd.f32 %v877, %v910
  %v927 = vadd.f32 %v878, %v911
  %v928 = vadd.f32 %v879, %v912
  %v929 = vadd.f32 %v880, %v913
  %v930 = vadd.f32 %v881, %v914
  %v931 = vadd.f32 %v882, %v915
  %v932 = vadd.f32 %v883, %v916
  %v933 = vadd.f32 %v884, %v917
  %v934 = vld [vmem:[%s636 + $0x2] sm:$0xff]
  %v935 = vld [vmem:[%s636 + $0x12] sm:$0xff]
  %v936 = vld [vmem:[%s636 + $0x22] sm:$0xff]
  %v937 = vld [vmem:[%s636 + $0x32] sm:$0xff]
  %v938 = vld [vmem:[%s636 + $0x42] sm:$0xff]
  %v939 = vld [vmem:[%s636 + $0x52] sm:$0xff]
  %v940 = vld [vmem:[%s636 + $0x62] sm:$0xff]
  %v941 = vld [vmem:[%s636 + $0x72] sm:$0xff]
  %v942 = vld [vmem:[%s636 + $0xa2] sm:$0xff]
  %v943 = vld [vmem:[%s636 + $0xb2] sm:$0xff]
  %v944 = vld [vmem:[%s636 + $0xc2] sm:$0xff]
  %v945 = vld [vmem:[%s636 + $0xd2] sm:$0xff]
  %v946 = vld [vmem:[%s636 + $0xe2] sm:$0xff]
  %v947 = vld [vmem:[%s636 + $0xf2] sm:$0xff]
  %v948 = vld [vmem:[%s636 + $0x102] sm:$0xff]
  %v949 = vld [vmem:[%s636 + $0x112] sm:$0xff]
  %v950 = vperm.slane %v687, 2
  %v951 = vmul.f32 %v934, %v950
  %v952 = vmul.f32 %v935, %v950
  %v953 = vmul.f32 %v936, %v950
  %v954 = vmul.f32 %v937, %v950
  %v955 = vmul.f32 %v938, %v950
  %v956 = vmul.f32 %v939, %v950
  %v957 = vmul.f32 %v940, %v950
  %v958 = vmul.f32 %v941, %v950
  %v959 = vmul.f32 %v942, %v950
  %v960 = vmul.f32 %v943, %v950
  %v961 = vmul.f32 %v944, %v950
  %v962 = vmul.f32 %v945, %v950
  %v963 = vmul.f32 %v946, %v950
  %v964 = vmul.f32 %v947, %v950
  %v965 = vmul.f32 %v948, %v950
  %v966 = vmul.f32 %v949, %v950
  %v967 = vadd.f32 %v918, %v951
  %v968 = vadd.f32 %v919, %v952
  %v969 = vadd.f32 %v920, %v953
  %v970 = vadd.f32 %v921, %v954
  %v971 = vadd.f32 %v922, %v955
  %v972 = vadd.f32 %v923, %v956
  %v973 = vadd.f32 %v924, %v957
  %v974 = vadd.f32 %v925, %v958
  %v975 = vadd.f32 %v926, %v959
  %v976 = vadd.f32 %v927, %v960
  %v977 = vadd.f32 %v928, %v961
  %v978 = vadd.f32 %v929, %v962
  %v979 = vadd.f32 %v930, %v963
  %v980 = vadd.f32 %v931, %v964
  %v981 = vadd.f32 %v932, %v965
  %v982 = vadd.f32 %v933, %v966
  %s983 = scalar_lea.vmem [#allocation2], 32
  %v984 = vld [vmem:[%s983] sm:$0xff]
  %v985 = vld [vmem:[%s983 + $0x10] sm:$0xff]
  %v986 = vld [vmem:[%s983 + $0x20] sm:$0xff]
  %v987 = vld [vmem:[%s983 + $0x30] sm:$0xff]
  %v988 = vld [vmem:[%s983 + $0x40] sm:$0xff]
  %v989 = vld [vmem:[%s983 + $0x50] sm:$0xff]
  %v990 = vld [vmem:[%s983 + $0x60] sm:$0xff]
  %v991 = vld [vmem:[%s983 + $0x70] sm:$0xff]
  %v992 = vld [vmem:[%s983 + $0xa0] sm:$0xff]
  %v993 = vld [vmem:[%s983 + $0xb0] sm:$0xff]
  %v994 = vld [vmem:[%s983 + $0xc0] sm:$0xff]
  %v995 = vld [vmem:[%s983 + $0xd0] sm:$0xff]
  %v996 = vld [vmem:[%s983 + $0xe0] sm:$0xff]
  %v997 = vld [vmem:[%s983 + $0xf0] sm:$0xff]
  %v998 = vld [vmem:[%s983 + $0x100] sm:$0xff]
  %v999 = vld [vmem:[%s983 + $0x110] sm:$0xff]
  %v1000 = vperm.slane %v688, 0
  %v1001 = vmul.f32 %v984, %v1000
  %v1002 = vmul.f32 %v985, %v1000
  %v1003 = vmul.f32 %v986, %v1000
  %v1004 = vmul.f32 %v987, %v1000
  %v1005 = vmul.f32 %v988, %v1000
  %v1006 = vmul.f32 %v989, %v1000
  %v1007 = vmul.f32 %v990, %v1000
  %v1008 = vmul.f32 %v991, %v1000
  %v1009 = vmul.f32 %v992, %v1000
  %v1010 = vmul.f32 %v993, %v1000
  %v1011 = vmul.f32 %v994, %v1000
  %v1012 = vmul.f32 %v995, %v1000
  %v1013 = vmul.f32 %v996, %v1000
  %v1014 = vmul.f32 %v997, %v1000
  %v1015 = vmul.f32 %v998, %v1000
  %v1016 = vmul.f32 %v999, %v1000
  %v1017 = vadd.f32 %v967, %v1001
  %v1018 = vadd.f32 %v968, %v1002
  %v1019 = vadd.f32 %v969, %v1003
  %v1020 = vadd.f32 %v970, %v1004
  %v1021 = vadd.f32 %v971, %v1005
  %v1022 = vadd.f32 %v972, %v1006
  %v1023 = vadd.f32 %v973, %v1007
  %v1024 = vadd.f32 %v974, %v1008
  %v1025 = vadd.f32 %v975, %v1009
  %v1026 = vadd.f32 %v976, %v1010
  %v1027 = vadd.f32 %v977, %v1011
  %v1028 = vadd.f32 %v978, %v1012
  %v1029 = vadd.f32 %v979, %v1013
  %v1030 = vadd.f32 %v980, %v1014
  %v1031 = vadd.f32 %v981, %v1015
  %v1032 = vadd.f32 %v982, %v1016
  %v1033 = vld [vmem:[%s983 + $0x1] sm:$0xff]
  %v1034 = vld [vmem:[%s983 + $0x11] sm:$0xff]
  %v1035 = vld [vmem:[%s983 + $0x21] sm:$0xff]
  %v1036 = vld [vmem:[%s983 + $0x31] sm:$0xff]
  %v1037 = vld [vmem:[%s983 + $0x41] sm:$0xff]
  %v1038 = vld [vmem:[%s983 + $0x51] sm:$0xff]
  %v1039 = vld [vmem:[%s983 + $0x61] sm:$0xff]
  %v1040 = vld [vmem:[%s983 + $0x71] sm:$0xff]
  %v1041 = vld [vmem:[%s983 + $0xa1] sm:$0xff]
  %v1042 = vld [vmem:[%s983 + $0xb1] sm:$0xff]
  %v1043 = vld [vmem:[%s983 + $0xc1] sm:$0xff]
  %v1044 = vld [vmem:[%s983 + $0xd1] sm:$0xff]
  %v1045 = vld [vmem:[%s983 + $0xe1] sm:$0xff]
  %v1046 = vld [vmem:[%s983 + $0xf1] sm:$0xff]
  %v1047 = vld [vmem:[%s983 + $0x101] sm:$0xff]
  %v1048 = vld [vmem:[%s983 + $0x111] sm:$0xff]
  %v1049 = vperm.slane %v688, 1
  %v1050 = vmul.f32 %v1033, %v1049
  %v1051 = vmul.f32 %v1034, %v1049
  %v1052 = vmul.f32 %v1035, %v1049
  %v1053 = vmul.f32 %v1036, %v1049
  %v1054 = vmul.f32 %v1037, %v1049
  %v1055 = vmul.f32 %v1038, %v1049
  %v1056 = vmul.f32 %v1039, %v1049
  %v1057 = vmul.f32 %v1040, %v1049
  %v1058 = vmul.f32 %v1041, %v1049
  %v1059 = vmul.f32 %v1042, %v1049
  %v1060 = vmul.f32 %v1043, %v1049
  %v1061 = vmul.f32 %v1044, %v1049
  %v1062 = vmul.f32 %v1045, %v1049
  %v1063 = vmul.f32 %v1046, %v1049
  %v1064 = vmul.f32 %v1047, %v1049
  %v1065 = vmul.f32 %v1048, %v1049
  %v1066 = vadd.f32 %v1017, %v1050
  %v1067 = vadd.f32 %v1018, %v1051
  %v1068 = vadd.f32 %v1019, %v1052
  %v1069 = vadd.f32 %v1020, %v1053
  %v1070 = vadd.f32 %v1021, %v1054
  %v1071 = vadd.f32 %v1022, %v1055
  %v1072 = vadd.f32 %v1023, %v1056
  %v1073 = vadd.f32 %v1024, %v1057
  %v1074 = vadd.f32 %v1025, %v1058
  %v1075 = vadd.f32 %v1026, %v1059
  %v1076 = vadd.f32 %v1027, %v1060
  %v1077 = vadd.f32 %v1028, %v1061
  %v1078 = vadd.f32 %v1029, %v1062
  %v1079 = vadd.f32 %v1030, %v1063
  %v1080 = vadd.f32 %v1031, %v1064
  %v1081 = vadd.f32 %v1032, %v1065
  %v1082 = vld [vmem:[%s983 + $0x2] sm:$0xff]
  %v1083 = vld [vmem:[%s983 + $0x12] sm:$0xff]
  %v1084 = vld [vmem:[%s983 + $0x22] sm:$0xff]
  %v1085 = vld [vmem:[%s983 + $0x32] sm:$0xff]
  %v1086 = vld [vmem:[%s983 + $0x42] sm:$0xff]
  %v1087 = vld [vmem:[%s983 + $0x52] sm:$0xff]
  %v1088 = vld [vmem:[%s983 + $0x62] sm:$0xff]
  %v1089 = vld [vmem:[%s983 + $0x72] sm:$0xff]
  %v1090 = vld [vmem:[%s983 + $0xa2] sm:$0xff]
  %v1091 = vld [vmem:[%s983 + $0xb2] sm:$0xff]
  %v1092 = vld [vmem:[%s983 + $0xc2] sm:$0xff]
  %v1093 = vld [vmem:[%s983 + $0xd2] sm:$0xff]
  %v1094 = vld [vmem:[%s983 + $0xe2] sm:$0xff]
  %v1095 = vld [vmem:[%s983 + $0xf2] sm:$0xff]
  %v1096 = vld [vmem:[%s983 + $0x102] sm:$0xff]
  %v1097 = vld [vmem:[%s983 + $0x112] sm:$0xff]
  %v1098 = vperm.slane %v688, 2
  %v1099 = vmul.f32 %v1082, %v1098
  %v1100 = vmul.f32 %v1083, %v1098
  %v1101 = vmul.f32 %v1084, %v1098
  %v1102 = vmul.f32 %v1085, %v1098
  %v1103 = vmul.f32 %v1086, %v1098
  %v1104 = vmul.f32 %v1087, %v1098
  %v1105 = vmul.f32 %v1088, %v1098
  %v1106 = vmul.f32 %v1089, %v1098
  %v1107 = vmul.f32 %v1090, %v1098
  %v1108 = vmul.f32 %v1091, %v1098
  %v1109 = vmul.f32 %v1092, %v1098
  %v1110 = vmul.f32 %v1093, %v1098
  %v1111 = vmul.f32 %v1094, %v1098
  %v1112 = vmul.f32 %v1095, %v1098
  %v1113 = vmul.f32 %v1096, %v1098
  %v1114 = vmul.f32 %v1097, %v1098
  %v1115 = vadd.f32 %v1066, %v1099
  %v1116 = vadd.f32 %v1067, %v1100
  %v1117 = vadd.f32 %v1068, %v1101
  %v1118 = vadd.f32 %v1069, %v1102
  %v1119 = vadd.f32 %v1070, %v1103
  %v1120 = vadd.f32 %v1071, %v1104
  %v1121 = vadd.f32 %v1072, %v1105
  %v1122 = vadd.f32 %v1073, %v1106
  %v1123 = vadd.f32 %v1074, %v1107
  %v1124 = vadd.f32 %v1075, %v1108
  %v1125 = vadd.f32 %v1076, %v1109
  %v1126 = vadd.f32 %v1077, %v1110
  %v1127 = vadd.f32 %v1078, %v1111
  %v1128 = vadd.f32 %v1079, %v1112
  %v1129 = vadd.f32 %v1080, %v1113
  %v1130 = vadd.f32 %v1081, %v1114
  %v1131 = vld [vmem:[%s5] sm:$0xff]
  %v1132 = vld [vmem:[%s5 + $0x8] sm:$0xff]
  %v1133 = vld [vmem:[%s5 + $0x10] sm:$0xff]
  %v1134 = vld [vmem:[%s5 + $0x18] sm:$0xff]
  %v1135 = vld [vmem:[%s6] sm:$0xff]
  %v1136 = vld [vmem:[%s6 + $0x8] sm:$0xff]
  %v1137 = vld [vmem:[%s6 + $0x10] sm:$0xff]
  %v1138 = vld [vmem:[%s6 + $0x18] sm:$0xff]
  %1140 = vset.pattern.permute.xlu0 0
  %1141 = vperm.xlu0 %1140, %v1135
  %v1142 = vpop.permute.xlu0 %1141
  %1145 = vset.pattern.permute.xlu0 0
  %1146 = vperm.xlu0 %1145, %v1136
  %v1147 = vpop.permute.xlu0 %1146
  %1150 = vset.pattern.permute.xlu0 0
  %1151 = vperm.xlu0 %1150, %v1137
  %v1152 = vpop.permute.xlu0 %1151
  %1155 = vset.pattern.permute.xlu0 0
  %1156 = vperm.xlu0 %1155, %v1138
  %v1157 = vpop.permute.xlu0 %1156
  %v1160 = vsel %vm625, %v1131, 0
  %v1163 = vsel %vm625, %v1132, 0
  %v1166 = vsel %vm625, %v1133, 0
  %v1169 = vsel %vm625, %v1134, 0
  %v1172 = vsel %vm625, %v1115, 0
  %v1175 = vsel %vm625, %v1116, 0
  %v1178 = vsel %vm625, %v1117, 0
  %v1181 = vsel %vm625, %v1118, 0
  %v1184 = vsel %vm625, %v1119, 0
  %v1187 = vsel %vm625, %v1120, 0
  %v1190 = vsel %vm625, %v1121, 0
  %v1193 = vsel %vm625, %v1122, 0
  %v1196 = vsel %vm625, %v1123, 0
  %v1199 = vsel %vm625, %v1124, 0
  %v1202 = vsel %vm625, %v1125, 0
  %v1205 = vsel %vm625, %v1126, 0
  %v1208 = vsel %vm625, %v1127, 0
  %v1211 = vsel %vm625, %v1128, 0
  %v1214 = vsel %vm625, %v1129, 0
  %v1217 = vsel %vm625, %v1130, 0
  %1219 = vmatpush.xpose.msra.mxu0 %v1217
  %1220 = vmatpush.xpose.msra.mxu0 %v1214
  %1221 = vmatpush.xpose.msra.mxu0 %v1211
  %1222 = vmatpush.xpose.msra.mxu0 %v1208
  %1223 = vmatpush.xpose.msra.mxu0 %v1205
  %1224 = vmatpush.xpose.msra.mxu0 %v1202
  %1225 = vmatpush.xpose.msra.mxu0 %v1199
  %1226 = vmatpush.xpose.msra.mxu0 %v1196
  %1227 = vmatpush.xpose.msra.mxu0 %v1193
  %1228 = vmatpush.xpose.msra.mxu0 %v1190
  %1229 = vmatpush.xpose.msra.mxu0 %v1187
  %1230 = vmatpush.xpose.msra.mxu0 %v1184
  %1231 = vmatpush.xpose.msra.mxu0 %v1181
  %1232 = vmatpush.xpose.msra.mxu0 %v1178
  %1233 = vmatpush.xpose.msra.mxu0 %v1175
  %1234 = vmatpush.xpose.msra.mxu0 %v1172
  %1235 = vmatmul.f32.gmra.mxu0 %v1160
  %v1236 = vpop.f32.mrf.mxu0
  %v1237 = vadd.f32 %v1142, %v1236
  %1238 = vmatmul.f32.gmra.mxu0 %v1163
  %v1239 = vpop.f32.mrf.mxu0
  %v1240 = vadd.f32 %v1147, %v1239
  %1241 = vmatmul.f32.gmra.mxu0 %v1166
  %v1242 = vpop.f32.mrf.mxu0
  %v1243 = vadd.f32 %v1152, %v1242
  %1244 = vmatmul.f32.gmra.mxu0 %v1169
  %v1245 = vpop.f32.mrf.mxu0
  %v1246 = vadd.f32 %v1157, %v1245
  %1247 = vdwg.mxu0
  %1248 = vst [vmem:[%s7] sm:$0xff] %v1237
  %1249 = vst [vmem:[%s7 + $0x8] sm:$0xff] %v1240
  %1250 = vst [vmem:[%s7 + $0x10] sm:$0xff] %v1243
  %1251 = vst [vmem:[%s7 + $0x18] sm:$0xff] %v1246
  // Predicated region
  $region30: #{group_sep_talk_forward.1} parent=0 // pred_check
    _
  $region31: #{group_sep_talk_forward.1} parent=0 // pred_check_branch
    %1253 = sbr.rel (0) target = $region33
  $region32: #{group_sep_talk_forward.1} parent=0 // pred_region
    _
  $region33: #{group_sep_talk_forward.1} parent=0 // pred_fallthru
    _
  // Predicated region
  $region34: #{group_sep_talk_forward.1} parent=0 // pred_check
    _
  $region35: #{group_sep_talk_forward.1} parent=0 // pred_check_branch
    %1255 = sbr.rel (0) target = $region37
  $region36: #{group_sep_talk_forward.1} parent=0 // pred_region
    _
  $region37: #{group_sep_talk_forward.1} parent=0 // pred_fallthru
    _

</llo_original>
